<compile_context>
chip_gen: v7x
topology: tpu7x:2x2x1
jax: 0.10.0
libtpu: 0.0.40
codegen_flags: <defaults>
</compile_context>

<pallas_src>
import jax
import jax.numpy as jnp
from jax.experimental import pallas as pl
from jax.experimental.pallas import tpu as pltpu


# ----------------------------- helpers --------------------------------------


def _round_up(x, m):
    return (x + m - 1) // m * m


def _vmem_limit_bytes():
    # Budget ~3/4 of physical VMEM: 96 MiB on v5e/v6e (128 MiB), 48 MiB on v7x (64 MiB).
    cap = 128 * 1024 * 1024
    try:
        info = pltpu.get_tpu_info()
        cap = int(getattr(info, "vmem_capacity_bytes", cap) or cap)
    except Exception:
        pass
    return int(min(cap * 3 // 4, 96 * 1024 * 1024))


def _resident_spec(block_shape, index_map, single_buffer):
    """BlockSpec for a grid-constant (resident) operand.

    single_buffer=True requests one VMEM buffer (halves the weight footprint);
    otherwise the default double-buffering is used.
    """
    if single_buffer:
        return pl.BlockSpec(block_shape, index_map, pipeline_mode=pl.Buffered(1))
    return pl.BlockSpec(block_shape, index_map)


def _call_trying_single_buffer(build_and_call):
    """Run with single-buffered resident weights; fall back to default buffering
    if this Pallas build rejects pipeline_mode=pl.Buffered(1)."""
    try:
        return jax.block_until_ready(build_and_call(True))
    except Exception:
        return build_and_call(False)


# ----------------------------- Pallas kernels --------------------------------


def _input_proj_kernel(x_ref, w_ref, b_ref, o_ref):
    # (TM, Ep) @ (Ep, TN) -> (TM, TN), f32 accumulation, bf16 lane-dense store.
    acc = jnp.dot(x_ref[...], w_ref[...], preferred_element_type=jnp.float32)
    o_ref[...] = (acc + b_ref[...]).astype(o_ref.dtype)


def _make_recurrence_kernel(t_total):
    """Recurrence kernel over grid (batch_block, time_chunk)."""

    def kernel(xg_ref, whh_ref, o_ref, h_sc, c_sc):
        # xg_ref : (Tc, Bb, 4Hp) bf16  precomputed x-gates (bias folded), streamed
        # whh_ref: (Hp, 4Hp)     bf16  resident recurrent weight
        # o_ref  : (Bb, Hp)      f32   final hidden state (lane-dense)
        # h/c_sc : (Bb, Hp)      f32   state, persists across time chunks
        c_idx = pl.program_id(1)

        @pl.when(c_idx == 0)
        def _():
            h_sc[...] = jnp.zeros_like(h_sc)
            c_sc[...] = jnp.zeros_like(c_sc)

        Hp = h_sc.shape[-1]
        Tc = xg_ref.shape[0]
        # Ragged last chunk: steps at/after t_total are computed but never committed.
        n_valid = jnp.minimum(Tc, t_total - c_idx * Tc)

        def sig(x):
            # One EUP pass (tanh) instead of exp + reciprocal.
            return 0.5 * jnp.tanh(0.5 * x) + 0.5

        def step(i, carry):
            h, c = carry
            gates = xg_ref[i].astype(jnp.float32) + jnp.dot(
                h.astype(jnp.bfloat16), whh_ref[...],
                preferred_element_type=jnp.float32)            # (Bb, 4Hp) f32
            # lane-aligned gate blocks (Hp is a multiple of 128)
            i_g = sig(gates[:, 0 * Hp:1 * Hp])
            f_g = sig(gates[:, 1 * Hp:2 * Hp])
            g_g = jnp.tanh(gates[:, 2 * Hp:3 * Hp])
            o_g = sig(gates[:, 3 * Hp:4 * Hp])
            c_new = f_g * c + i_g * g_g
            h_new = o_g * jnp.tanh(c_new)
            keep = i < n_valid
            return (jnp.where(keep, h_new, h), jnp.where(keep, c_new, c))

        h, c = jax.lax.fori_loop(0, Tc, step, (h_sc[...], c_sc[...]),
                                 unroll=min(8, Tc))
        h_sc[...] = h
        c_sc[...] = c

        # Only the last chunk's state needs to reach HBM; skip redundant stores.
        @pl.when(c_idx == pl.num_programs(1) - 1)
        def _():
            o_ref[...] = h

    return kernel


# ------------------------------ host wrapper ---------------------------------


def _pad_gate_weight_t(w, in_dim_pad, H, Hp, dtype):
    """w: (4H, in_dim) PyTorch layout -> transposed, padded (in_dim_pad, 4*Hp)
    with each gate block placed at a 128-aligned lane offset k*Hp."""
    in_dim = w.shape[1]
    w_t = w.T.astype(jnp.float32)                       # (in_dim, 4H)
    out = jnp.zeros((in_dim_pad, 4 * Hp), jnp.float32)
    for k in range(4):
        out = out.at[:in_dim, k * Hp:k * Hp + H].set(w_t[:, k * H:(k + 1) * H])
    return out.astype(dtype)


def _pad_gate_bias(b, H, Hp):
    out = jnp.zeros((1, 4 * Hp), jnp.float32)
    for k in range(4):
        out = out.at[0, k * Hp:k * Hp + H].set(b[k * H:(k + 1) * H])
    return out


def lstm_forward(token_ids, params, *, time_chunk=32):
    """token_ids: (T, B) int32. Returns sigmoid(Linear(h_T)) squeezed -> (B,)."""
    emb = params["emb"]                   # (V+1, E)
    w_ih = params["w_ih"]                 # (4H, E)  PyTorch layout
    w_hh = params["w_hh"]                 # (4H, H)
    bias = params["b_ih"] + params["b_hh"]

    T, B = token_ids.shape
    E = emb.shape[1]
    H = w_hh.shape[1]

    Bp = _round_up(B, 16)                 # bf16 sublane pack is 16
    Ep = _round_up(E, 128)                # MXU K dim
    Hp = _round_up(H, 128)                # lane-aligned per-gate width
    G = 4 * Hp

    # --- recurrence time chunking (ragged last chunk handled in-kernel) ---
    Tc = max(1, min(time_chunk, T))
    T_pad = _round_up(T, Tc)
    n_chunks = T_pad // Tc

    # --- recurrence batch blocking: lets a 2-TensorCore chip (v7x) run the
    #     independent batch halves in parallel; one block otherwise ---
    if Bp >= 32 and Bp % 32 == 0:
        nb, Bb = 2, Bp // 2
    else:
        nb, Bb = 1, Bp

    # --- Phase-1 tiling, decoupled from the recurrence chunking ---
    t_tile = max(1, min(T_pad, 512 // Bp))      # ~512-row M tiles
    while T_pad % t_tile != 0:
        t_tile -= 1
    TM = t_tile * Bp
    num_m = T_pad // t_tile
    # Bound the W_ih^T block; tile the gate axis only if it would be too large.
    TN = G
    while TN % 256 == 0 and Ep * TN * 2 > 8 * 1024 * 1024:
        TN //= 2
    num_n = G // TN

    vmem_limit = _vmem_limit_bytes()

    # ---- glue in plain JAX: embedding gather + zero padding ----
    # nn.Dropout(0.4) is identity in eval mode.
    # TODO(synk): training-mode dropout and a fused in-kernel embedding gather
    # (scalar-prefetched token ids / DMA gather) are not implemented; the gather
    # stays in the JAX wrapper.
    x = emb[token_ids]                                             # (T, B, E) f32
    x_p = jnp.zeros((T_pad, Bp, Ep), jnp.bfloat16)
    x_p = x_p.at[:T, :B, :E].set(x.astype(jnp.bfloat16))
    x2d = x_p.reshape(T_pad * Bp, Ep)

    wih_p = _pad_gate_weight_t(w_ih, Ep, H, Hp, jnp.bfloat16)      # (Ep, G)
    whh_p = _pad_gate_weight_t(w_hh, Hp, H, Hp, jnp.bfloat16)      # (Hp, G)
    b_p = _pad_gate_bias(bias, H, Hp)                              # (1, G) f32

    # ---- Phase 1: batched input projection for all (padded) timesteps ----
    def phase1(single):
        return pl.pallas_call(
            _input_proj_kernel,
            out_shape=jax.ShapeDtypeStruct((T_pad * Bp, G), jnp.bfloat16),
            grid_spec=pltpu.PrefetchScalarGridSpec(
                num_scalar_prefetch=0,
                grid=(num_m, num_n),
                in_specs=[
                    pl.BlockSpec((TM, Ep), lambda m, n: (m, 0)),       # X rows
                    _resident_spec((Ep, TN), lambda m, n: (0, n),
                                   single and num_n == 1),             # W_ih^T
                    pl.BlockSpec((1, TN), lambda m, n: (0, n)),        # bias
                ],
                out_specs=pl.BlockSpec((TM, TN), lambda m, n: (m, n)),
            ),
            compiler_params=pltpu.CompilerParams(
                dimension_semantics=("parallel", "parallel"),
                vmem_limit_bytes=vmem_limit,
            ),
        )(x2d, wih_p, b_p)

    xg2d = _call_trying_single_buffer(phase1)
    xg = xg2d.reshape(T_pad, Bp, G)                                # (T_pad, Bp, 4Hp)

    # ---- Phase 2: time-chunked recurrence ----
    rec_kernel = _make_recurrence_kernel(T)

    def phase2(single):
        return pl.pallas_call(
            rec_kernel,
            out_shape=jax.ShapeDtypeStruct((Bp, Hp), jnp.float32),
            grid_spec=pltpu.PrefetchScalarGridSpec(
                num_scalar_prefetch=0,
                grid=(nb, n_chunks),
                in_specs=[
                    pl.BlockSpec((Tc, Bb, G), lambda b_, c: (c, b_, 0)),  # x-gates
                    _resident_spec((Hp, G), lambda b_, c: (0, 0), single),  # W_hh^T
                ],
                out_specs=pl.BlockSpec((Bb, Hp), lambda b_, c: (b_, 0)),
                scratch_shapes=[
                    pltpu.VMEM((Bb, Hp), jnp.float32),   # h state across chunks
                    pltpu.VMEM((Bb, Hp), jnp.float32),   # c state across chunks
                ],
            ),
            compiler_params=pltpu.CompilerParams(
                dimension_semantics=("parallel", "arbitrary"),
                vmem_limit_bytes=vmem_limit,
            ),
        )(xg, whh_p)

    h_last = _call_trying_single_buffer(phase2)

    # ---- final Linear(H,1) + sigmoid: one-time narrow op, kept in the wrapper ----
    hT = h_last[:B, :H]
    logit = hT @ params["w_out"].T.astype(jnp.float32) + params["b_out"]
    return jnp.squeeze(jax.nn.sigmoid(logit), axis=-1)             # (B,)


# ------------------------------ reference ------------------------------------


def init_params(key, vocab_size, embedding_dim, hidden_dim):
    ks = jax.random.split(key, 7)
    s = 0.1
    return {
        "emb":   s * jax.random.normal(ks[0], (vocab_size + 1, embedding_dim), jnp.float32),
        "w_ih":  s * jax.random.normal(ks[1], (4 * hidden_dim, embedding_dim), jnp.float32),
        "w_hh":  s * jax.random.normal(ks[2], (4 * hidden_dim, hidden_dim), jnp.float32),
        "b_ih":  s * jax.random.normal(ks[3], (4 * hidden_dim,), jnp.float32),
        "b_hh":  s * jax.random.normal(ks[4], (4 * hidden_dim,), jnp.float32),
        "w_out": s * jax.random.normal(ks[5], (1, hidden_dim), jnp.float32),
        "b_out": s * jax.random.normal(ks[6], (1,), jnp.float32),
    }


def reference_forward(token_ids, params):
    """Pure-JAX f32 reference of the same forward pass (PyTorch i,f,g,o gate order)."""
    x = params["emb"][token_ids]                                  # (T, B, E)
    T, B, E = x.shape
    H = params["w_hh"].shape[1]
    b = params["b_ih"] + params["b_hh"]

    def step(carry, x_t):
        h, c = carry
        gates = x_t @ params["w_ih"].T + h @ params["w_hh"].T + b
        i = jax.nn.sigmoid(gates[:, 0 * H:1 * H])
        f = jax.nn.sigmoid(gates[:, 1 * H:2 * H])
        g = jnp.tanh(gates[:, 2 * H:3 * H])
        o = jax.nn.sigmoid(gates[:, 3 * H:4 * H])
        c = f * c + i * g
        h = o * jnp.tanh(c)
        return (h, c), None

    (hT, _), _ = jax.lax.scan(step, (jnp.zeros((B, H)), jnp.zeros((B, H))), x)
    logit = hT @ params["w_out"].T + params["b_out"]
    return jnp.squeeze(jax.nn.sigmoid(logit), axis=-1)


if __name__ == "__main__":
    vocab_size, embedding_dim, hidden_dim = 50, 16, 32
    seq_len, batch = 8, 4

    key = jax.random.PRNGKey(0)
    k_params, k_ids = jax.random.split(key)
    params = init_params(k_params, vocab_size, embedding_dim, hidden_dim)
    token_ids = jax.random.randint(k_ids, (seq_len, batch), 0, vocab_size + 1, jnp.int32)

    # time_chunk=3 with T=8 exercises both the cross-chunk h/c carry and the
    # ragged (masked) last chunk: chunks of 3, 3, 2 valid steps.
    out = lstm_forward(token_ids, params, time_chunk=3)
    out = jax.block_until_ready(out)

    ref = reference_forward(token_ids, params)
    assert out.shape == (batch,), out.shape
    # bf16 MXU operands (f32 accumulation / f32 state) vs f32 reference
    assert jnp.allclose(out, ref, atol=2e-2, rtol=2e-2), (out, ref)

    print("KERNEL_OK")
</pallas_src>

<mosaic_0001>
module attributes {stable_mosaic.version = 11 : i64} {
  func.func @_input_proj_kernel(%arg0: i32, %arg1: i32, %arg2: memref<144x128xbf16, #tpu.memory_space<vmem>>, %arg3: memref<128x512xbf16, #tpu.memory_space<vmem>>, %arg4: memref<1x512xf32, #tpu.memory_space<vmem>>, %arg5: memref<144x512xbf16, #tpu.memory_space<vmem>>) attributes {dimension_semantics = [#tpu.dimension_semantics<parallel>, #tpu.dimension_semantics<parallel>], iteration_bounds = array<i64: 1, 1>, scalar_prefetch = 0 : i64, scratch_operands = 0 : i64, tpu.core_type = #tpu.core_type<tc>, window_params = [{transform_indices = @transform_0, window_bounds = array<i64: 144, 128>}, {pipeline_mode = #tpu.pipeline_mode<synchronous>, transform_indices = @transform_1, window_bounds = array<i64: 128, 512>}, {transform_indices = @transform_2, window_bounds = array<i64: 1, 512>}, {transform_indices = @transform_3, window_bounds = array<i64: 144, 512>}]} {
    %c0 = arith.constant 0 : index
    %c0_0 = arith.constant 0 : index
    %0 = vector.load %arg2[%c0, %c0_0] : memref<144x128xbf16, #tpu.memory_space<vmem>>, vector<144x128xbf16>
    %c0_1 = arith.constant 0 : index
    %c0_2 = arith.constant 0 : index
    %1 = vector.load %arg3[%c0_1, %c0_2] : memref<128x512xbf16, #tpu.memory_space<vmem>>, vector<128x512xbf16>
    %cst = arith.constant dense<0.000000e+00> : vector<144x512xf32>
    %2 = tpu.matmul %0, %1, %cst {dimension_numbers = #tpu.dot_dimension_numbers<[1], [0], [0], [1], [0, 0, 1, 1], [], []>} : vector<144x128xbf16>, vector<128x512xbf16>, vector<144x512xf32> -> vector<144x512xf32>
    %c0_3 = arith.constant 0 : index
    %c0_4 = arith.constant 0 : index
    %3 = vector.load %arg4[%c0_3, %c0_4] : memref<1x512xf32, #tpu.memory_space<vmem>>, vector<1x512xf32>
    %4 = vector.broadcast %3 : vector<1x512xf32> to vector<144x512xf32>
    %5 = arith.addf %2, %4 : vector<144x512xf32>
    %6 = arith.truncf %5 : vector<144x512xf32> to vector<144x512xbf16>
    %c0_5 = arith.constant 0 : index
    %c0_6 = arith.constant 0 : index
    %7 = vector.load %arg5[%c0_5, %c0_6] : memref<144x512xbf16, #tpu.memory_space<vmem>>, vector<144x512xbf16>
    tpu.vector_store %arg5[%c0_5, %c0_6], %6 {strides = array<i32>} : memref<144x512xbf16, #tpu.memory_space<vmem>>, vector<144x512xbf16>,
    return
  }
  func.func @transform_0(%arg0: i32, %arg1: i32) -> (i32, i32) {
    %c0_i32 = arith.constant 0 : i32
    %c0_i32_0 = arith.constant 0 : i32
    return %arg0, %c0_i32 : i32, i32
  }
  func.func @transform_1(%arg0: i32, %arg1: i32) -> (i32, i32) {
    %c0_i32 = arith.constant 0 : i32
    %c0_i32_0 = arith.constant 0 : i32
    return %c0_i32, %arg1 : i32, i32
  }
  func.func @transform_2(%arg0: i32, %arg1: i32) -> (i32, i32) {
    %c0_i32 = arith.constant 0 : i32
    %c0_i32_0 = arith.constant 0 : i32
    return %c0_i32, %arg1 : i32, i32
  }
  func.func @transform_3(%arg0: i32, %arg1: i32) -> (i32, i32) {
    %c0_i32 = arith.constant 0 : i32
    return %arg0, %arg1 : i32, i32
  }
}

module attributes {stable_mosaic.version = 11 : i64} {
  func.func @_input_proj_kernel(%arg0: i32, %arg1: i32, %arg2: memref<144x128xbf16, #tpu.memory_space<vmem>>, %arg3: memref<128x512xbf16, #tpu.memory_space<vmem>>, %arg4: memref<1x512xf32, #tpu.memory_space<vmem>>, %arg5: memref<144x512xbf16, #tpu.memory_space<vmem>>) attributes {dimension_semantics = [#tpu.dimension_semantics<parallel>, #tpu.dimension_semantics<parallel>], iteration_bounds = array<i64: 1, 1>, scalar_prefetch = 0 : i64, scratch_operands = 0 : i64, tpu.core_type = #tpu.core_type<tc>, window_params = [{transform_indices = @transform_0, window_bounds = array<i64: 144, 128>}, {transform_indices = @transform_1, window_bounds = array<i64: 128, 512>}, {transform_indices = @transform_2, window_bounds = array<i64: 1, 512>}, {transform_indices = @transform_3, window_bounds = array<i64: 144, 512>}]} {
    %c0 = arith.constant 0 : index
    %c0_0 = arith.constant 0 : index
    %0 = vector.load %arg2[%c0, %c0_0] : memref<144x128xbf16, #tpu.memory_space<vmem>>, vector<144x128xbf16>
    %c0_1 = arith.constant 0 : index
    %c0_2 = arith.constant 0 : index
    %1 = vector.load %arg3[%c0_1, %c0_2] : memref<128x512xbf16, #tpu.memory_space<vmem>>, vector<128x512xbf16>
    %cst = arith.constant dense<0.000000e+00> : vector<144x512xf32>
    %2 = tpu.matmul %0, %1, %cst {dimension_numbers = #tpu.dot_dimension_numbers<[1], [0], [0], [1], [0, 0, 1, 1], [], []>} : vector<144x128xbf16>, vector<128x512xbf16>, vector<144x512xf32> -> vector<144x512xf32>
    %c0_3 = arith.constant 0 : index
    %c0_4 = arith.constant 0 : index
    %3 = vector.load %arg4[%c0_3, %c0_4] : memref<1x512xf32, #tpu.memory_space<vmem>>, vector<1x512xf32>
    %4 = vector.broadcast %3 : vector<1x512xf32> to vector<144x512xf32>
    %5 = arith.addf %2, %4 : vector<144x512xf32>
    %6 = arith.truncf %5 : vector<144x512xf32> to vector<144x512xbf16>
    %c0_5 = arith.constant 0 : index
    %c0_6 = arith.constant 0 : index
    %7 = vector.load %arg5[%c0_5, %c0_6] : memref<144x512xbf16, #tpu.memory_space<vmem>>, vector<144x512xbf16>
    tpu.vector_store %arg5[%c0_5, %c0_6], %6 {strides = array<i32>} : memref<144x512xbf16, #tpu.memory_space<vmem>>, vector<144x512xbf16>,
    return
  }
  func.func @transform_0(%arg0: i32, %arg1: i32) -> (i32, i32) {
    %c0_i32 = arith.constant 0 : i32
    %c0_i32_0 = arith.constant 0 : i32
    return %arg0, %c0_i32 : i32, i32
  }
  func.func @transform_1(%arg0: i32, %arg1: i32) -> (i32, i32) {
    %c0_i32 = arith.constant 0 : i32
    %c0_i32_0 = arith.constant 0 : i32
    return %c0_i32, %arg1 : i32, i32
  }
  func.func @transform_2(%arg0: i32, %arg1: i32) -> (i32, i32) {
    %c0_i32 = arith.constant 0 : i32
    %c0_i32_0 = arith.constant 0 : i32
    return %c0_i32, %arg1 : i32, i32
  }
  func.func @transform_3(%arg0: i32, %arg1: i32) -> (i32, i32) {
    %c0_i32 = arith.constant 0 : i32
    return %arg0, %arg1 : i32, i32
  }
}

</mosaic_0001>

<llo_original>
// kernel: tpu_custom_call.1
$region0: #{tpu_custom_call.1}
  #allocation0 [shape = 'u32[]', space=smem, size = 0x4, offset = 0x4, fixed_abs, tag = 'smem constant byte address 0x4 - core index']
  #allocation1 [shape = 'u32[144,128]{1,0:T(1,128)}', space=vmem, size = 0x12000, scoped, tag = 'internal scratch']
  %s0 = inlined_call_operand.hbm [shape: bf16[144,128], index: 0, kind: input, shape index: {}]
  %s1 = inlined_call_operand.hbm [shape: bf16[128,512], index: 1, kind: input, shape index: {}]
  %s2 = inlined_call_operand.hbm [shape: f32[1,512], index: 2, kind: input, shape index: {}]
  %s3 = inlined_call_operand.hbm [shape: bf16[144,512], index: 3, kind: output, shape index: {}]
  %s4 = sld [smem:[#allocation0]]
  $region34: #{tpu_custom_call.1} parent=0
    _
  %s6 = ssub.s32 1, %s4
  %s7 = scalar_select 0, %s6, %s4
  $region1: #{tpu_custom_call.1} parent=0
    #allocation2 [shape = 'u8[36864]{0}', space=vmem, size = 0x9000, scoped, tag = 'input window, operand 0, single buffered']
    #allocation3 [shape = 's32[1]{0}', space=sflag, size = 0x4, scoped, tag = 'scoped memory for tpu_custom_call.1']
    #allocation4 [shape = 's32[1]{0}', space=sflag, size = 0x4, scoped, tag = 'scoped memory for tpu_custom_call.1']
    #allocation5 [shape = 'u8[131072]{0}', space=vmem, size = 0x20000, scoped, tag = 'input window, operand 1, single buffered']
    #allocation6 [shape = 's32[1]{0}', space=sflag, size = 0x4, scoped, tag = 'scoped memory for tpu_custom_call.1']
    #allocation7 [shape = 'u8[2048]{0}', space=vmem, size = 0x800, scoped, tag = 'input window, operand 2, single buffered']
    #allocation8 [shape = 'u8[147456]{0}', space=vmem, size = 0x24000, scoped, tag = 'output window, operand 0, single buffered']
    %8 = vsyncpa [#allocation3], 0
    %9 = vsyncpa [#allocation6], 0
    %10 = vsyncpa [#allocation4], 0
    // Predicated region
    $region2: #{tpu_custom_call.1} parent=1 // pred_check
      _
    $region3: #{tpu_custom_call.1} parent=1 // pred_check_branch
      %12 = sbr.rel (0) target = $region5
    $region4: #{tpu_custom_call.1} parent=1 // pred_region
      %s14 = ssub.s32 1152, 1152
      %15 = vsyncadd [#allocation3], %s14
      %s16 = sshll.u32 [#allocation2], 4
      %s17 = int_to_ptr.vmem [resolvable:$true] %s16
      %22 = dma.hbm_to_vmem [thread:$0]  %s0, 1152, %s17, [#allocation3], 64, 64, 4
    $region5: #{tpu_custom_call.1} parent=1 // pred_fallthru
      _
    // Predicated region
    $region6: #{tpu_custom_call.1} parent=1 // pred_check
      _
    $region7: #{tpu_custom_call.1} parent=1 // pred_check_branch
      %24 = sbr.rel (0) target = $region9
    $region8: #{tpu_custom_call.1} parent=1 // pred_region
      %s26 = ssub.s32 4096, 4096
      %27 = vsyncadd [#allocation6], %s26
      %s28 = sshll.u32 [#allocation5], 4
      %s29 = int_to_ptr.vmem [resolvable:$true] %s28
      %34 = dma.hbm_to_vmem [thread:$0]  %s1, 4096, %s29, [#allocation6], 256, 256, 16
    $region9: #{tpu_custom_call.1} parent=1 // pred_fallthru
      _
    // Predicated region
    $region10: #{tpu_custom_call.1} parent=1 // pred_check
      _
    $region11: #{tpu_custom_call.1} parent=1 // pred_check_branch
      %36 = sbr.rel (0) target = $region13
    $region12: #{tpu_custom_call.1} parent=1 // pred_region
      %s38 = ssub.s32 64, 64
      %39 = vsyncadd [#allocation6], %s38
      %s41 = sshll.u32 [#allocation7], 4
      %s42 = int_to_ptr.vmem [resolvable:$true] %s41
      %44 = dma.hbm_to_vmem [thread:$0]  %s2, 64, %s42, [#allocation6]
    $region13: #{tpu_custom_call.1} parent=1 // pred_fallthru
      _
    // Predicated region
    $region14: #{tpu_custom_call.1} parent=1 // pred_check
      _
    $region15: #{tpu_custom_call.1} parent=1 // pred_check_branch
      %46 = sbr.rel (0) target = $region17
    $region16: #{tpu_custom_call.1} parent=1 // pred_region
      %47 = dma.done [#allocation3], 1152
    $region17: #{tpu_custom_call.1} parent=1 // pred_fallthru
      _
    // Predicated region
    $region18: #{tpu_custom_call.1} parent=1 // pred_check
      _
    $region19: #{tpu_custom_call.1} parent=1 // pred_check_branch
      %49 = sbr.rel (0) target = $region21
    $region20: #{tpu_custom_call.1} parent=1 // pred_region
      %50 = dma.done [#allocation6], 4096
    $region21: #{tpu_custom_call.1} parent=1 // pred_fallthru
      _
    // Predicated region
    $region22: #{tpu_custom_call.1} parent=1 // pred_check
      _
    $region23: #{tpu_custom_call.1} parent=1 // pred_check_branch
      %52 = sbr.rel (0) target = $region25
    $region24: #{tpu_custom_call.1} parent=1 // pred_region
      %53 = dma.done [#allocation6], 64
    $region25: #{tpu_custom_call.1} parent=1 // pred_fallthru
      _
    %v55 = vld [vmem:[#allocation2] sm:$0xf]
    %v56 = vld [vmem:[#allocation2 + $0x4] sm:$0xf]
    %v57 = vld [vmem:[#allocation2 + $0x8] sm:$0xf]
    %v58 = vld [vmem:[#allocation2 + $0xc] sm:$0xf]
    %v59 = vld [vmem:[#allocation2 + $0x10] sm:$0xf]
    %v60 = vld [vmem:[#allocation2 + $0x14] sm:$0xf]
    %v61 = vld [vmem:[#allocation2 + $0x18] sm:$0xf]
    %v62 = vld [vmem:[#allocation2 + $0x1c] sm:$0xf]
    %v63 = vld [vmem:[#allocation2 + $0x20] sm:$0xf]
    %v64 = vld [vmem:[#allocation2 + $0x24] sm:$0xf]
    %v65 = vld [vmem:[#allocation2 + $0x28] sm:$0xf]
    %v66 = vld [vmem:[#allocation2 + $0x2c] sm:$0xf]
    %v67 = vld [vmem:[#allocation2 + $0x30] sm:$0xf]
    %v68 = vld [vmem:[#allocation2 + $0x34] sm:$0xf]
    %v69 = vld [vmem:[#allocation2 + $0x38] sm:$0xf]
    %v70 = vld [vmem:[#allocation2 + $0x3c] sm:$0xf]
    %v71 = vld [vmem:[#allocation2 + $0x40] sm:$0xf]
    %v72 = vld [vmem:[#allocation2 + $0x44] sm:$0xf]
    %v73 = vld [vmem:[#allocation5] sm:$0xff]
    %v74 = vld [vmem:[#allocation5 + $0x8] sm:$0xff]
    %v75 = vld [vmem:[#allocation5 + $0x10] sm:$0xff]
    %v76 = vld [vmem:[#allocation5 + $0x18] sm:$0xff]
    %v77 = vld [vmem:[#allocation5 + $0x20] sm:$0xff]
    %v78 = vld [vmem:[#allocation5 + $0x28] sm:$0xff]
    %v79 = vld [vmem:[#allocation5 + $0x30] sm:$0xff]
    %v80 = vld [vmem:[#allocation5 + $0x38] sm:$0xff]
    %v81 = vld [vmem:[#allocation5 + $0x40] sm:$0xff]
    %v82 = vld [vmem:[#allocation5 + $0x48] sm:$0xff]
    %v83 = vld [vmem:[#allocation5 + $0x50] sm:$0xff]
    %v84 = vld [vmem:[#allocation5 + $0x58] sm:$0xff]
    %v85 = vld [vmem:[#allocation5 + $0x60] sm:$0xff]
    %v86 = vld [vmem:[#allocation5 + $0x68] sm:$0xff]
    %v87 = vld [vmem:[#allocation5 + $0x70] sm:$0xff]
    %v88 = vld [vmem:[#allocation5 + $0x78] sm:$0xff]
    %v89 = vld [vmem:[#allocation5 + $0x80] sm:$0xff]
    %v90 = vld [vmem:[#allocation5 + $0x88] sm:$0xff]
    %v91 = vld [vmem:[#allocation5 + $0x90] sm:$0xff]
    %v92 = vld [vmem:[#allocation5 + $0x98] sm:$0xff]
    %v93 = vld [vmem:[#allocation5 + $0xa0] sm:$0xff]
    %v94 = vld [vmem:[#allocation5 + $0xa8] sm:$0xff]
    %v95 = vld [vmem:[#allocation5 + $0xb0] sm:$0xff]
    %v96 = vld [vmem:[#allocation5 + $0xb8] sm:$0xff]
    %v97 = vld [vmem:[#allocation5 + $0xc0] sm:$0xff]
    %v98 = vld [vmem:[#allocation5 + $0xc8] sm:$0xff]
    %v99 = vld [vmem:[#allocation5 + $0xd0] sm:$0xff]
    %v100 = vld [vmem:[#allocation5 + $0xd8] sm:$0xff]
    %v101 = vld [vmem:[#allocation5 + $0xe0] sm:$0xff]
    %v102 = vld [vmem:[#allocation5 + $0xe8] sm:$0xff]
    %v103 = vld [vmem:[#allocation5 + $0xf0] sm:$0xff]
    %v104 = vld [vmem:[#allocation5 + $0xf8] sm:$0xff]
    %v105 = vld [vmem:[#allocation7] sm:$0xf]
    %v107 = vlaneseq
    %v108 = vshrl.u32 %v107, 7
    %v109 = vsub.s32 0, %v108
    %v110 = vrot.slane %v105, %v109
    %v111 = vlaneseq
    %v112 = vshrl.u32 %v111, 7
    %v113 = vsub.s32 1, %v112
    %v114 = vrot.slane %v105, %v113
    %v115 = vlaneseq
    %v116 = vshrl.u32 %v115, 7
    %v117 = vsub.s32 2, %v116
    %v118 = vrot.slane %v105, %v117
    %v119 = vlaneseq
    %v120 = vshrl.u32 %v119, 7
    %v121 = vsub.s32 3, %v120
    %v122 = vrot.slane %v105, %v121
    %v145 = vunpack.c.l.b16 %v55
    %v146 = vunpack.c.l.b16 %v56
    %v147 = vunpack.c.l.b16 %v57
    %v148 = vunpack.c.l.b16 %v58
    %v149 = vunpack.c.l.b16 %v59
    %v150 = vunpack.c.l.b16 %v60
    %v151 = vunpack.c.l.b16 %v61
    %v152 = vunpack.c.l.b16 %v62
    %v153 = vunpack.c.l.b16 %v63
    %v154 = vunpack.c.l.b16 %v64
    %v155 = vunpack.c.l.b16 %v65
    %v156 = vunpack.c.l.b16 %v66
    %v157 = vunpack.c.l.b16 %v67
    %v158 = vunpack.c.l.b16 %v68
    %v159 = vunpack.c.l.b16 %v69
    %v160 = vunpack.c.l.b16 %v70
    %v161 = vunpack.c.l.b16 %v71
    %v162 = vunpack.c.l.b16 %v72
    %v163 = vpack.c.b16 %v146, %v145
    %v164 = vpack.c.b16 %v148, %v147
    %v165 = vpack.c.b16 %v150, %v149
    %v166 = vpack.c.b16 %v152, %v151
    %v167 = vpack.c.b16 %v154, %v153
    %v168 = vpack.c.b16 %v156, %v155
    %v169 = vpack.c.b16 %v158, %v157
    %v170 = vpack.c.b16 %v160, %v159
    %v171 = vpack.c.b16 %v162, %v161
    %v213 = vunpack.c.l.b16 %v73
    %v214 = vunpack.c.h.b16 %v73
    %v215 = vunpack.c.l.b16 %v74
    %v216 = vunpack.c.h.b16 %v74
    %v217 = vunpack.c.l.b16 %v75
    %v218 = vunpack.c.h.b16 %v75
    %v219 = vunpack.c.l.b16 %v76
    %v220 = vunpack.c.h.b16 %v76
    %v221 = vunpack.c.l.b16 %v77
    %v222 = vunpack.c.h.b16 %v77
    %v223 = vunpack.c.l.b16 %v78
    %v224 = vunpack.c.h.b16 %v78
    %v225 = vunpack.c.l.b16 %v79
    %v226 = vunpack.c.h.b16 %v79
    %v227 = vunpack.c.l.b16 %v80
    %v228 = vunpack.c.h.b16 %v80
    %v229 = vunpack.c.l.b16 %v81
    %v230 = vunpack.c.h.b16 %v81
    %v231 = vunpack.c.l.b16 %v82
    %v232 = vunpack.c.h.b16 %v82
    %v233 = vunpack.c.l.b16 %v83
    %v234 = vunpack.c.h.b16 %v83
    %v235 = vunpack.c.l.b16 %v84
    %v236 = vunpack.c.h.b16 %v84
    %v237 = vunpack.c.l.b16 %v85
    %v238 = vunpack.c.h.b16 %v85
    %v239 = vunpack.c.l.b16 %v86
    %v240 = vunpack.c.h.b16 %v86
    %v241 = vunpack.c.l.b16 %v87
    %v242 = vunpack.c.h.b16 %v87
    %v243 = vunpack.c.l.b16 %v88
    %v244 = vunpack.c.h.b16 %v88
    %v245 = vunpack.c.l.b16 %v89
    %v246 = vunpack.c.h.b16 %v89
    %v247 = vunpack.c.l.b16 %v90
    %v248 = vunpack.c.h.b16 %v90
    %v249 = vunpack.c.l.b16 %v91
    %v250 = vunpack.c.h.b16 %v91
    %v251 = vunpack.c.l.b16 %v92
    %v252 = vunpack.c.h.b16 %v92
    %v253 = vunpack.c.l.b16 %v93
    %v254 = vunpack.c.h.b16 %v93
    %v255 = vunpack.c.l.b16 %v94
    %v256 = vunpack.c.h.b16 %v94
    %v257 = vunpack.c.l.b16 %v95
    %v258 = vunpack.c.h.b16 %v95
    %v259 = vunpack.c.l.b16 %v96
    %v260 = vunpack.c.h.b16 %v96
    %v261 = vunpack.c.l.b16 %v97
    %v262 = vunpack.c.h.b16 %v97
    %v263 = vunpack.c.l.b16 %v98
    %v264 = vunpack.c.h.b16 %v98
    %v265 = vunpack.c.l.b16 %v99
    %v266 = vunpack.c.h.b16 %v99
    %v267 = vunpack.c.l.b16 %v100
    %v268 = vunpack.c.h.b16 %v100
    %v269 = vunpack.c.l.b16 %v101
    %v270 = vunpack.c.h.b16 %v101
    %v271 = vunpack.c.l.b16 %v102
    %v272 = vunpack.c.h.b16 %v102
    %v273 = vunpack.c.l.b16 %v103
    %v274 = vunpack.c.h.b16 %v103
    %v275 = vunpack.c.l.b16 %v104
    %v276 = vunpack.c.h.b16 %v104
    %v277 = vpack.c.b16 %v217, %v213
    %v278 = vpack.c.b16 %v218, %v214
    %v279 = vpack.c.b16 %v219, %v215
    %v280 = vpack.c.b16 %v220, %v216
    %v281 = vpack.c.b16 %v225, %v221
    %v282 = vpack.c.b16 %v226, %v222
    %v283 = vpack.c.b16 %v227, %v223
    %v284 = vpack.c.b16 %v228, %v224
    %v285 = vpack.c.b16 %v233, %v229
    %v286 = vpack.c.b16 %v234, %v230
    %v287 = vpack.c.b16 %v235, %v231
    %v288 = vpack.c.b16 %v236, %v232
    %v289 = vpack.c.b16 %v241, %v237
    %v290 = vpack.c.b16 %v242, %v238
    %v291 = vpack.c.b16 %v243, %v239
    %v292 = vpack.c.b16 %v244, %v240
    %v293 = vpack.c.b16 %v249, %v245
    %v294 = vpack.c.b16 %v250, %v246
    %v295 = vpack.c.b16 %v251, %v247
    %v296 = vpack.c.b16 %v252, %v248
    %v297 = vpack.c.b16 %v257, %v253
    %v298 = vpack.c.b16 %v258, %v254
    %v299 = vpack.c.b16 %v259, %v255
    %v300 = vpack.c.b16 %v260, %v256
    %v301 = vpack.c.b16 %v265, %v261
    %v302 = vpack.c.b16 %v266, %v262
    %v303 = vpack.c.b16 %v267, %v263
    %v304 = vpack.c.b16 %v268, %v264
    %v305 = vpack.c.b16 %v273, %v269
    %v306 = vpack.c.b16 %v274, %v270
    %v307 = vpack.c.b16 %v275, %v271
    %v308 = vpack.c.b16 %v276, %v272
    %341 = vmatprep.subr.bf16.mxu0 %v278
    %342 = vmatpush1.bf16.msra.mxu0 %v277
    %343 = vmatprep.subr.bf16.mxu0 %v282
    %344 = vmatpush1.bf16.msra.mxu0 %v281
    %345 = vmatprep.subr.bf16.mxu0 %v286
    %346 = vmatpush1.bf16.msra.mxu0 %v285
    %347 = vmatprep.subr.bf16.mxu0 %v290
    %348 = vmatpush1.bf16.msra.mxu0 %v289
    %349 = vmatprep.subr.bf16.mxu0 %v294
    %350 = vmatpush1.bf16.msra.mxu0 %v293
    %351 = vmatprep.subr.bf16.mxu0 %v298
    %352 = vmatpush1.bf16.msra.mxu0 %v297
    %353 = vmatprep.subr.bf16.mxu0 %v302
    %354 = vmatpush1.bf16.msra.mxu0 %v301
    %355 = vmatprep.subr.bf16.mxu0 %v306
    %356 = vmatpush1.bf16.msra.mxu0 %v305
    %357 = vmatprep.subr.bf16.mxu0 0
    %358 = vmatpush1.bf16.msra.mxu0 0
    %359 = vmatprep.subr.bf16.mxu0 0
    %360 = vmatpush1.bf16.msra.mxu0 0
    %361 = vmatprep.subr.bf16.mxu0 0
    %362 = vmatpush1.bf16.msra.mxu0 0
    %363 = vmatprep.subr.bf16.mxu0 0
    %364 = vmatpush1.bf16.msra.mxu0 0
    %365 = vmatprep.subr.bf16.mxu0 0
    %366 = vmatpush1.bf16.msra.mxu0 0
    %367 = vmatprep.subr.bf16.mxu0 0
    %368 = vmatpush1.bf16.msra.mxu0 0
    %369 = vmatprep.subr.bf16.mxu0 0
    %370 = vmatpush1.bf16.msra.mxu0 0
    %371 = vmatprep.subr.bf16.mxu0 0
    %372 = vmatpush1.bf16.msra.mxu0 0
    %373 = vmatprep.mubr.bf16.mxu0 0
    %374 = vmatmul.mubr.bf16.gmra.mrb[0].mxu0 %v163
    %v375 = vpop.f32.mrb[0].mxu0
    %v376 = vadd.f32 %v110, %v375
    %v377 = vpop.f32.mrb[0].mxu0
    %v378 = vadd.f32 %v114, %v377
    %v379 = vpop.f32.mrb[0].mxu0
    %v380 = vadd.f32 %v110, %v379
    %v381 = vpop.f32.mrb[0].mxu0
    %v382 = vadd.f32 %v114, %v381
    %383 = vmatprep.mubr.bf16.mxu0 0
    %384 = vmatmul.mubr.bf16.gmra.mrb[0].mxu0 %v164
    %v385 = vpop.f32.mrb[0].mxu0
    %v386 = vadd.f32 %v110, %v385
    %v387 = vpop.f32.mrb[0].mxu0
    %v388 = vadd.f32 %v114, %v387
    %v389 = vpop.f32.mrb[0].mxu0
    %v390 = vadd.f32 %v110, %v389
    %v391 = vpop.f32.mrb[0].mxu0
    %v392 = vadd.f32 %v114, %v391
    %393 = vmatprep.mubr.bf16.mxu0 0
    %394 = vmatmul.mubr.bf16.gmra.mrb[0].mxu0 %v165
    %v395 = vpop.f32.mrb[0].mxu0
    %v396 = vadd.f32 %v110, %v395
    %v397 = vpop.f32.mrb[0].mxu0
    %v398 = vadd.f32 %v114, %v397
    %v399 = vpop.f32.mrb[0].mxu0
    %v400 = vadd.f32 %v110, %v399
    %v401 = vpop.f32.mrb[0].mxu0
    %v402 = vadd.f32 %v114, %v401
    %403 = vmatprep.mubr.bf16.mxu0 0
    %404 = vmatmul.mubr.bf16.gmra.mrb[0].mxu0 %v166
    %v405 = vpop.f32.mrb[0].mxu0
    %v406 = vadd.f32 %v110, %v405
    %v407 = vpop.f32.mrb[0].mxu0
    %v408 = vadd.f32 %v114, %v407
    %v409 = vpop.f32.mrb[0].mxu0
    %v410 = vadd.f32 %v110, %v409
    %v411 = vpop.f32.mrb[0].mxu0
    %v412 = vadd.f32 %v114, %v411
    %413 = vmatprep.mubr.bf16.mxu0 0
    %414 = vmatmul.mubr.bf16.gmra.mrb[0].mxu0 %v167
    %v415 = vpop.f32.mrb[0].mxu0
    %v416 = vadd.f32 %v110, %v415
    %v417 = vpop.f32.mrb[0].mxu0
    %v418 = vadd.f32 %v114, %v417
    %v419 = vpop.f32.mrb[0].mxu0
    %v420 = vadd.f32 %v110, %v419
    %v421 = vpop.f32.mrb[0].mxu0
    %v422 = vadd.f32 %v114, %v421
    %423 = vmatprep.mubr.bf16.mxu0 0
    %424 = vmatmul.mubr.bf16.gmra.mrb[0].mxu0 %v168
    %v425 = vpop.f32.mrb[0].mxu0
    %v426 = vadd.f32 %v110, %v425
    %v427 = vpop.f32.mrb[0].mxu0
    %v428 = vadd.f32 %v114, %v427
    %v429 = vpop.f32.mrb[0].mxu0
    %v430 = vadd.f32 %v110, %v429
    %v431 = vpop.f32.mrb[0].mxu0
    %v432 = vadd.f32 %v114, %v431
    %433 = vmatprep.mubr.bf16.mxu0 0
    %434 = vmatmul.mubr.bf16.gmra.mrb[0].mxu0 %v169
    %v435 = vpop.f32.mrb[0].mxu0
    %v436 = vadd.f32 %v110, %v435
    %v437 = vpop.f32.mrb[0].mxu0
    %v438 = vadd.f32 %v114, %v437
    %v439 = vpop.f32.mrb[0].mxu0
    %v440 = vadd.f32 %v110, %v439
    %v441 = vpop.f32.mrb[0].mxu0
    %v442 = vadd.f32 %v114, %v441
    %443 = vmatprep.mubr.bf16.mxu0 0
    %444 = vmatmul.mubr.bf16.gmra.mrb[0].mxu0 %v170
    %v445 = vpop.f32.mrb[0].mxu0
    %v446 = vadd.f32 %v110, %v445
    %v447 = vpop.f32.mrb[0].mxu0
    %v448 = vadd.f32 %v114, %v447
    %v449 = vpop.f32.mrb[0].mxu0
    %v450 = vadd.f32 %v110, %v449
    %v451 = vpop.f32.mrb[0].mxu0
    %v452 = vadd.f32 %v114, %v451
    %453 = vmatprep.mubr.bf16.mxu0 0
    %454 = vmatmul.mubr.bf16.gmra.mrb[0].mxu0 %v171
    %v455 = vpop.f32.mrb[0].mxu0
    %v456 = vadd.f32 %v110, %v455
    %v457 = vpop.f32.mrb[0].mxu0
    %v458 = vadd.f32 %v114, %v457
    %v459 = vpop.f32.mrb[0].mxu0
    %v460 = vadd.f32 %v110, %v459
    %v461 = vpop.f32.mrb[0].mxu0
    %v462 = vadd.f32 %v114, %v461
    %463 = vdwg.mxu0
    %464 = vmatprep.subr.bf16.mxu0 %v280
    %465 = vmatpush1.bf16.msra.mxu0 %v279
    %466 = vmatprep.subr.bf16.mxu0 %v284
    %467 = vmatpush1.bf16.msra.mxu0 %v283
    %468 = vmatprep.subr.bf16.mxu0 %v288
    %469 = vmatpush1.bf16.msra.mxu0 %v287
    %470 = vmatprep.subr.bf16.mxu0 %v292
    %471 = vmatpush1.bf16.msra.mxu0 %v291
    %472 = vmatprep.subr.bf16.mxu0 %v296
    %473 = vmatpush1.bf16.msra.mxu0 %v295
    %474 = vmatprep.subr.bf16.mxu0 %v300
    %475 = vmatpush1.bf16.msra.mxu0 %v299
    %476 = vmatprep.subr.bf16.mxu0 %v304
    %477 = vmatpush1.bf16.msra.mxu0 %v303
    %478 = vmatprep.subr.bf16.mxu0 %v308
    %479 = vmatpush1.bf16.msra.mxu0 %v307
    %480 = vmatprep.subr.bf16.mxu0 0
    %481 = vmatpush1.bf16.msra.mxu0 0
    %482 = vmatprep.subr.bf16.mxu0 0
    %483 = vmatpush1.bf16.msra.mxu0 0
    %484 = vmatprep.subr.bf16.mxu0 0
    %485 = vmatpush1.bf16.msra.mxu0 0
    %486 = vmatprep.subr.bf16.mxu0 0
    %487 = vmatpush1.bf16.msra.mxu0 0
    %488 = vmatprep.subr.bf16.mxu0 0
    %489 = vmatpush1.bf16.msra.mxu0 0
    %490 = vmatprep.subr.bf16.mxu0 0
    %491 = vmatpush1.bf16.msra.mxu0 0
    %492 = vmatprep.subr.bf16.mxu0 0
    %493 = vmatpush1.bf16.msra.mxu0 0
    %494 = vmatprep.subr.bf16.mxu0 0
    %495 = vmatpush1.bf16.msra.mxu0 0
    %496 = vmatprep.mubr.bf16.mxu0 0
    %497 = vmatmul.mubr.bf16.gmra.mrb[0].mxu0 %v163
    %v498 = vpop.f32.mrb[0].mxu0
    %v499 = vadd.f32 %v118, %v498
    %v500 = vpop.f32.mrb[0].mxu0
    %v501 = vadd.f32 %v122, %v500
    %v502 = vpop.f32.mrb[0].mxu0
    %v503 = vadd.f32 %v118, %v502
    %v504 = vpop.f32.mrb[0].mxu0
    %v505 = vadd.f32 %v122, %v504
    %506 = vmatprep.mubr.bf16.mxu0 0
    %507 = vmatmul.mubr.bf16.gmra.mrb[0].mxu0 %v164
    %v508 = vpop.f32.mrb[0].mxu0
    %v509 = vadd.f32 %v118, %v508
    %v510 = vpop.f32.mrb[0].mxu0
    %v511 = vadd.f32 %v122, %v510
    %v512 = vpop.f32.mrb[0].mxu0
    %v513 = vadd.f32 %v118, %v512
    %v514 = vpop.f32.mrb[0].mxu0
    %v515 = vadd.f32 %v122, %v514
    %516 = vmatprep.mubr.bf16.mxu0 0
    %517 = vmatmul.mubr.bf16.gmra.mrb[0].mxu0 %v165
    %v518 = vpop.f32.mrb[0].mxu0
    %v519 = vadd.f32 %v118, %v518
    %v520 = vpop.f32.mrb[0].mxu0
    %v521 = vadd.f32 %v122, %v520
    %v522 = vpop.f32.mrb[0].mxu0
    %v523 = vadd.f32 %v118, %v522
    %v524 = vpop.f32.mrb[0].mxu0
    %v525 = vadd.f32 %v122, %v524
    %526 = vmatprep.mubr.bf16.mxu0 0
    %527 = vmatmul.mubr.bf16.gmra.mrb[0].mxu0 %v166
    %v528 = vpop.f32.mrb[0].mxu0
    %v529 = vadd.f32 %v118, %v528
    %v530 = vpop.f32.mrb[0].mxu0
    %v531 = vadd.f32 %v122, %v530
    %v532 = vpop.f32.mrb[0].mxu0
    %v533 = vadd.f32 %v118, %v532
    %v534 = vpop.f32.mrb[0].mxu0
    %v535 = vadd.f32 %v122, %v534
    %536 = vmatprep.mubr.bf16.mxu0 0
    %537 = vmatmul.mubr.bf16.gmra.mrb[0].mxu0 %v167
    %v538 = vpop.f32.mrb[0].mxu0
    %v539 = vadd.f32 %v118, %v538
    %v540 = vpop.f32.mrb[0].mxu0
    %v541 = vadd.f32 %v122, %v540
    %v542 = vpop.f32.mrb[0].mxu0
    %v543 = vadd.f32 %v118, %v542
    %v544 = vpop.f32.mrb[0].mxu0
    %v545 = vadd.f32 %v122, %v544
    %546 = vmatprep.mubr.bf16.mxu0 0
    %547 = vmatmul.mubr.bf16.gmra.mrb[0].mxu0 %v168
    %v548 = vpop.f32.mrb[0].mxu0
    %v549 = vadd.f32 %v118, %v548
    %v550 = vpop.f32.mrb[0].mxu0
    %v551 = vadd.f32 %v122, %v550
    %v552 = vpop.f32.mrb[0].mxu0
    %v553 = vadd.f32 %v118, %v552
    %v554 = vpop.f32.mrb[0].mxu0
    %v555 = vadd.f32 %v122, %v554
    %556 = vmatprep.mubr.bf16.mxu0 0
    %557 = vmatmul.mubr.bf16.gmra.mrb[0].mxu0 %v169
    %v558 = vpop.f32.mrb[0].mxu0
    %v559 = vadd.f32 %v118, %v558
    %v560 = vpop.f32.mrb[0].mxu0
    %v561 = vadd.f32 %v122, %v560
    %v562 = vpop.f32.mrb[0].mxu0
    %v563 = vadd.f32 %v118, %v562
    %v564 = vpop.f32.mrb[0].mxu0
    %v565 = vadd.f32 %v122, %v564
    %566 = vmatprep.mubr.bf16.mxu0 0
    %567 = vmatmul.mubr.bf16.gmra.mrb[0].mxu0 %v170
    %v568 = vpop.f32.mrb[0].mxu0
    %v569 = vadd.f32 %v118, %v568
    %v570 = vpop.f32.mrb[0].mxu0
    %v571 = vadd.f32 %v122, %v570
    %v572 = vpop.f32.mrb[0].mxu0
    %v573 = vadd.f32 %v118, %v572
    %v574 = vpop.f32.mrb[0].mxu0
    %v575 = vadd.f32 %v122, %v574
    %576 = vmatprep.mubr.bf16.mxu0 0
    %577 = vmatmul.mubr.bf16.gmra.mrb[0].mxu0 %v171
    %v578 = vpop.f32.mrb[0].mxu0
    %v579 = vadd.f32 %v118, %v578
    %v580 = vpop.f32.mrb[0].mxu0
    %v581 = vadd.f32 %v122, %v580
    %v582 = vpop.f32.mrb[0].mxu0
    %v583 = vadd.f32 %v118, %v582
    %v584 = vpop.f32.mrb[0].mxu0
    %v585 = vadd.f32 %v122, %v584
    %586 = vdwg.mxu0
    %v587 = vpack.c.bf16 %v380, %v376
    %v588 = vpack.c.bf16 %v382, %v378
    %v589 = vpack.c.bf16 %v503, %v499
    %v590 = vpack.c.bf16 %v505, %v501
    %v591 = vpack.c.bf16 %v390, %v386
    %v592 = vpack.c.bf16 %v392, %v388
    %v593 = vpack.c.bf16 %v513, %v509
    %v594 = vpack.c.bf16 %v515, %v511
    %v595 = vpack.c.bf16 %v400, %v396
    %v596 = vpack.c.bf16 %v402, %v398
    %v597 = vpack.c.bf16 %v523, %v519
    %v598 = vpack.c.bf16 %v525, %v521
    %v599 = vpack.c.bf16 %v410, %v406
    %v600 = vpack.c.bf16 %v412, %v408
    %v601 = vpack.c.bf16 %v533, %v529
    %v602 = vpack.c.bf16 %v535, %v531
    %v603 = vpack.c.bf16 %v420, %v416
    %v604 = vpack.c.bf16 %v422, %v418
    %v605 = vpack.c.bf16 %v543, %v539
    %v606 = vpack.c.bf16 %v545, %v541
    %v607 = vpack.c.bf16 %v430, %v426
    %v608 = vpack.c.bf16 %v432, %v428
    %v609 = vpack.c.bf16 %v553, %v549
    %v610 = vpack.c.bf16 %v555, %v551
    %v611 = vpack.c.bf16 %v440, %v436
    %v612 = vpack.c.bf16 %v442, %v438
    %v613 = vpack.c.bf16 %v563, %v559
    %v614 = vpack.c.bf16 %v565, %v561
    %v615 = vpack.c.bf16 %v450, %v446
    %v616 = vpack.c.bf16 %v452, %v448
    %v617 = vpack.c.bf16 %v573, %v569
    %v618 = vpack.c.bf16 %v575, %v571
    %v619 = vpack.c.bf16 %v460, %v456
    %v620 = vpack.c.bf16 %v462, %v458
    %v621 = vpack.c.bf16 %v583, %v579
    %v622 = vpack.c.bf16 %v585, %v581
    %v659 = vunpack.c.l.b16 %v587
    %v660 = vunpack.c.l.b16 %v588
    %v661 = vunpack.c.l.b16 %v589
    %v662 = vunpack.c.l.b16 %v590
    %v663 = vunpack.c.h.b16 %v587
    %v664 = vunpack.c.h.b16 %v588
    %v665 = vunpack.c.h.b16 %v589
    %v666 = vunpack.c.h.b16 %v590
    %v667 = vunpack.c.l.b16 %v591
    %v668 = vunpack.c.l.b16 %v592
    %v669 = vunpack.c.l.b16 %v593
    %v670 = vunpack.c.l.b16 %v594
    %v671 = vunpack.c.h.b16 %v591
    %v672 = vunpack.c.h.b16 %v592
    %v673 = vunpack.c.h.b16 %v593
    %v674 = vunpack.c.h.b16 %v594
    %v675 = vunpack.c.l.b16 %v595
    %v676 = vunpack.c.l.b16 %v596
    %v677 = vunpack.c.l.b16 %v597
    %v678 = vunpack.c.l.b16 %v598
    %v679 = vunpack.c.h.b16 %v595
    %v680 = vunpack.c.h.b16 %v596
    %v681 = vunpack.c.h.b16 %v597
    %v682 = vunpack.c.h.b16 %v598
    %v683 = vunpack.c.l.b16 %v599
    %v684 = vunpack.c.l.b16 %v600
    %v685 = vunpack.c.l.b16 %v601
    %v686 = vunpack.c.l.b16 %v602
    %v687 = vunpack.c.h.b16 %v599
    %v688 = vunpack.c.h.b16 %v600
    %v689 = vunpack.c.h.b16 %v601
    %v690 = vunpack.c.h.b16 %v602
    %v691 = vunpack.c.l.b16 %v603
    %v692 = vunpack.c.l.b16 %v604
    %v693 = vunpack.c.l.b16 %v605
    %v694 = vunpack.c.l.b16 %v606
    %v695 = vunpack.c.h.b16 %v603
    %v696 = vunpack.c.h.b16 %v604
    %v697 = vunpack.c.h.b16 %v605
    %v698 = vunpack.c.h.b16 %v606
    %v699 = vunpack.c.l.b16 %v607
    %v700 = vunpack.c.l.b16 %v608
    %v701 = vunpack.c.l.b16 %v609
    %v702 = vunpack.c.l.b16 %v610
    %v703 = vunpack.c.h.b16 %v607
    %v704 = vunpack.c.h.b16 %v608
    %v705 = vunpack.c.h.b16 %v609
    %v706 = vunpack.c.h.b16 %v610
    %v707 = vunpack.c.l.b16 %v611
    %v708 = vunpack.c.l.b16 %v612
    %v709 = vunpack.c.l.b16 %v613
    %v710 = vunpack.c.l.b16 %v614
    %v711 = vunpack.c.h.b16 %v611
    %v712 = vunpack.c.h.b16 %v612
    %v713 = vunpack.c.h.b16 %v613
    %v714 = vunpack.c.h.b16 %v614
    %v715 = vunpack.c.l.b16 %v615
    %v716 = vunpack.c.l.b16 %v616
    %v717 = vunpack.c.l.b16 %v617
    %v718 = vunpack.c.l.b16 %v618
    %v719 = vunpack.c.h.b16 %v615
    %v720 = vunpack.c.h.b16 %v616
    %v721 = vunpack.c.h.b16 %v617
    %v722 = vunpack.c.h.b16 %v618
    %v723 = vunpack.c.l.b16 %v619
    %v724 = vunpack.c.l.b16 %v620
    %v725 = vunpack.c.l.b16 %v621
    %v726 = vunpack.c.l.b16 %v622
    %v727 = vunpack.c.h.b16 %v619
    %v728 = vunpack.c.h.b16 %v620
    %v729 = vunpack.c.h.b16 %v621
    %v730 = vunpack.c.h.b16 %v622
    %v731 = vpack.c.b16 %v660, %v659
    %v732 = vpack.c.b16 %v662, %v661
    %v733 = vpack.c.b16 %v664, %v663
    %v734 = vpack.c.b16 %v666, %v665
    %v735 = vpack.c.b16 %v668, %v667
    %v736 = vpack.c.b16 %v670, %v669
    %v737 = vpack.c.b16 %v672, %v671
    %v738 = vpack.c.b16 %v674, %v673
    %v739 = vpack.c.b16 %v676, %v675
    %v740 = vpack.c.b16 %v678, %v677
    %v741 = vpack.c.b16 %v680, %v679
    %v742 = vpack.c.b16 %v682, %v681
    %v743 = vpack.c.b16 %v684, %v683
    %v744 = vpack.c.b16 %v686, %v685
    %v745 = vpack.c.b16 %v688, %v687
    %v746 = vpack.c.b16 %v690, %v689
    %v747 = vpack.c.b16 %v692, %v691
    %v748 = vpack.c.b16 %v694, %v693
    %v749 = vpack.c.b16 %v696, %v695
    %v750 = vpack.c.b16 %v698, %v697
    %v751 = vpack.c.b16 %v700, %v699
    %v752 = vpack.c.b16 %v702, %v701
    %v753 = vpack.c.b16 %v704, %v703
    %v754 = vpack.c.b16 %v706, %v705
    %v755 = vpack.c.b16 %v708, %v707
    %v756 = vpack.c.b16 %v710, %v709
    %v757 = vpack.c.b16 %v712, %v711
    %v758 = vpack.c.b16 %v714, %v713
    %v759 = vpack.c.b16 %v716, %v715
    %v760 = vpack.c.b16 %v718, %v717
    %v761 = vpack.c.b16 %v720, %v719
    %v762 = vpack.c.b16 %v722, %v721
    %v763 = vpack.c.b16 %v724, %v723
    %v764 = vpack.c.b16 %v726, %v725
    %v765 = vpack.c.b16 %v728, %v727
    %v766 = vpack.c.b16 %v730, %v729
    %803 = vst [vmem:[#allocation8] sm:$0xff] %v731
    %804 = vst [vmem:[#allocation8 + $0x8] sm:$0xff] %v732
    %805 = vst [vmem:[#allocation8 + $0x10] sm:$0xff] %v733
    %806 = vst [vmem:[#allocation8 + $0x18] sm:$0xff] %v734
    %807 = vst [vmem:[#allocation8 + $0x20] sm:$0xff] %v735
    %808 = vst [vmem:[#allocation8 + $0x28] sm:$0xff] %v736
    %809 = vst [vmem:[#allocation8 + $0x30] sm:$0xff] %v737
    %810 = vst [vmem:[#allocation8 + $0x38] sm:$0xff] %v738
    %811 = vst [vmem:[#allocation8 + $0x40] sm:$0xff] %v739
    %812 = vst [vmem:[#allocation8 + $0x48] sm:$0xff] %v740
    %813 = vst [vmem:[#allocation8 + $0x50] sm:$0xff] %v741
    %814 = vst [vmem:[#allocation8 + $0x58] sm:$0xff] %v742
    %815 = vst [vmem:[#allocation8 + $0x60] sm:$0xff] %v743
    %816 = vst [vmem:[#allocation8 + $0x68] sm:$0xff] %v744
    %817 = vst [vmem:[#allocation8 + $0x70] sm:$0xff] %v745
    %818 = vst [vmem:[#allocation8 + $0x78] sm:$0xff] %v746
    %819 = vst [vmem:[#allocation8 + $0x80] sm:$0xff] %v747
    %820 = vst [vmem:[#allocation8 + $0x88] sm:$0xff] %v748
    %821 = vst [vmem:[#allocation8 + $0x90] sm:$0xff] %v749
    %822 = vst [vmem:[#allocation8 + $0x98] sm:$0xff] %v750
    %823 = vst [vmem:[#allocation8 + $0xa0] sm:$0xff] %v751
    %824 = vst [vmem:[#allocation8 + $0xa8] sm:$0xff] %v752
    %825 = vst [vmem:[#allocation8 + $0xb0] sm:$0xff] %v753
    %826 = vst [vmem:[#allocation8 + $0xb8] sm:$0xff] %v754
    %827 = vst [vmem:[#allocation8 + $0xc0] sm:$0xff] %v755
    %828 = vst [vmem:[#allocation8 + $0xc8] sm:$0xff] %v756
    %829 = vst [vmem:[#allocation8 + $0xd0] sm:$0xff] %v757
    %830 = vst [vmem:[#allocation8 + $0xd8] sm:$0xff] %v758
    %831 = vst [vmem:[#allocation8 + $0xe0] sm:$0xff] %v759
    %832 = vst [vmem:[#allocation8 + $0xe8] sm:$0xff] %v760
    %833 = vst [vmem:[#allocation8 + $0xf0] sm:$0xff] %v761
    %834 = vst [vmem:[#allocation8 + $0xf8] sm:$0xff] %v762
    %835 = vst [vmem:[#allocation8 + $0x100] sm:$0xff] %v763
    %836 = vst [vmem:[#allocation8 + $0x108] sm:$0xff] %v764
    %837 = vst [vmem:[#allocation8 + $0x110] sm:$0xff] %v765
    %838 = vst [vmem:[#allocation8 + $0x118] sm:$0xff] %v766
    // Predicated region
    $region26: #{tpu_custom_call.1} parent=1 // pred_check
      _
    $region27: #{tpu_custom_call.1} parent=1 // pred_check_branch
      %840 = sbr.rel (0) target = $region29
    $region28: #{tpu_custom_call.1} parent=1 // pred_region
      %s842 = ssub.s32 4608, 4608
      %843 = vsyncadd [#allocation4], %s842
      %s844 = sshll.u32 [#allocation8], 4
      %s845 = int_to_ptr.vmem [resolvable:$true] %s844
      %850 = dma.vmem_to_hbm [thread:$0]  %s845, 4608, %s3, [#allocation4], 256, 256, 16
    $region29: #{tpu_custom_call.1} parent=1 // pred_fallthru
      _
    // Predicated region
    $region30: #{tpu_custom_call.1} parent=1 // pred_check
      _
    $region31: #{tpu_custom_call.1} parent=1 // pred_check_branch
      %852 = sbr.rel (0) target = $region33
    $region32: #{tpu_custom_call.1} parent=1 // pred_region
      %853 = dma.done [#allocation4], 4608
    $region33: #{tpu_custom_call.1} parent=1 // pred_fallthru
      _
    %854 = vsyncpa [#allocation3], 1
    %855 = vsyncpa [#allocation6], 1
    %856 = vsyncpa [#allocation4], 1

// kernel: tpu_custom_call.1
$region0: #{tpu_custom_call.1}
  #allocation0 [shape = 'u32[]', space=smem, size = 0x4, offset = 0x4, fixed_abs, tag = 'smem constant byte address 0x4 - core index']
  #allocation1 [shape = 'u32[144,128]{1,0:T(1,128)}', space=vmem, size = 0x12000, scoped, tag = 'internal scratch']
  %s0 = inlined_call_operand.hbm [shape: bf16[144,128], index: 0, kind: input, shape index: {}]
  %s1 = inlined_call_operand.hbm [shape: bf16[128,512], index: 1, kind: input, shape index: {}]
  %s2 = inlined_call_operand.hbm [shape: f32[1,512], index: 2, kind: input, shape index: {}]
  %s3 = inlined_call_operand.hbm [shape: bf16[144,512], index: 3, kind: output, shape index: {}]
  %s4 = sld [smem:[#allocation0]]
  $region34: #{tpu_custom_call.1} parent=0
    _
  %s6 = ssub.s32 1, %s4
  %s7 = scalar_select 0, %s6, %s4
  $region1: #{tpu_custom_call.1} parent=0
    #allocation2 [shape = 'u8[36864]{0}', space=vmem, size = 0x9000, scoped, tag = 'input window, operand 0, single buffered']
    #allocation3 [shape = 's32[1]{0}', space=sflag, size = 0x4, scoped, tag = 'scoped memory for tpu_custom_call.1']
    #allocation4 [shape = 's32[1]{0}', space=sflag, size = 0x4, scoped, tag = 'scoped memory for tpu_custom_call.1']
    #allocation5 [shape = 'u8[131072]{0}', space=vmem, size = 0x20000, scoped, tag = 'input window, operand 1, single buffered']
    #allocation6 [shape = 's32[1]{0}', space=sflag, size = 0x4, scoped, tag = 'scoped memory for tpu_custom_call.1']
    #allocation7 [shape = 'u8[2048]{0}', space=vmem, size = 0x800, scoped, tag = 'input window, operand 2, single buffered']
    #allocation8 [shape = 'u8[147456]{0}', space=vmem, size = 0x24000, scoped, tag = 'output window, operand 0, single buffered']
    %8 = vsyncpa [#allocation3], 0
    %9 = vsyncpa [#allocation6], 0
    %10 = vsyncpa [#allocation4], 0
    // Predicated region
    $region2: #{tpu_custom_call.1} parent=1 // pred_check
      _
    $region3: #{tpu_custom_call.1} parent=1 // pred_check_branch
      %12 = sbr.rel (0) target = $region5
    $region4: #{tpu_custom_call.1} parent=1 // pred_region
      %s14 = ssub.s32 1152, 1152
      %15 = vsyncadd [#allocation3], %s14
      %s16 = sshll.u32 [#allocation2], 4
      %s17 = int_to_ptr.vmem [resolvable:$true] %s16
      %22 = dma.hbm_to_vmem [thread:$0]  %s0, 1152, %s17, [#allocation3], 64, 64, 4
    $region5: #{tpu_custom_call.1} parent=1 // pred_fallthru
      _
    // Predicated region
    $region6: #{tpu_custom_call.1} parent=1 // pred_check
      _
    $region7: #{tpu_custom_call.1} parent=1 // pred_check_branch
      %24 = sbr.rel (0) target = $region9
    $region8: #{tpu_custom_call.1} parent=1 // pred_region
      %s26 = ssub.s32 4096, 4096
      %27 = vsyncadd [#allocation6], %s26
      %s28 = sshll.u32 [#allocation5], 4
      %s29 = int_to_ptr.vmem [resolvable:$true] %s28
      %34 = dma.hbm_to_vmem [thread:$0]  %s1, 4096, %s29, [#allocation6], 256, 256, 16
    $region9: #{tpu_custom_call.1} parent=1 // pred_fallthru
      _
    // Predicated region
    $region10: #{tpu_custom_call.1} parent=1 // pred_check
      _
    $region11: #{tpu_custom_call.1} parent=1 // pred_check_branch
      %36 = sbr.rel (0) target = $region13
    $region12: #{tpu_custom_call.1} parent=1 // pred_region
      %s38 = ssub.s32 64, 64
      %39 = vsyncadd [#allocation6], %s38
      %s41 = sshll.u32 [#allocation7], 4
      %s42 = int_to_ptr.vmem [resolvable:$true] %s41
      %44 = dma.hbm_to_vmem [thread:$0]  %s2, 64, %s42, [#allocation6]
    $region13: #{tpu_custom_call.1} parent=1 // pred_fallthru
      _
    // Predicated region
    $region14: #{tpu_custom_call.1} parent=1 // pred_check
      _
    $region15: #{tpu_custom_call.1} parent=1 // pred_check_branch
      %46 = sbr.rel (0) target = $region17
    $region16: #{tpu_custom_call.1} parent=1 // pred_region
      %47 = dma.done [#allocation3], 1152
    $region17: #{tpu_custom_call.1} parent=1 // pred_fallthru
      _
    // Predicated region
    $region18: #{tpu_custom_call.1} parent=1 // pred_check
      _
    $region19: #{tpu_custom_call.1} parent=1 // pred_check_branch
      %49 = sbr.rel (0) target = $region21
    $region20: #{tpu_custom_call.1} parent=1 // pred_region
      %50 = dma.done [#allocation6], 4096
    $region21: #{tpu_custom_call.1} parent=1 // pred_fallthru
      _
    // Predicated region
    $region22: #{tpu_custom_call.1} parent=1 // pred_check
      _
    $region23: #{tpu_custom_call.1} parent=1 // pred_check_branch
      %52 = sbr.rel (0) target = $region25
    $region24: #{tpu_custom_call.1} parent=1 // pred_region
      %53 = dma.done [#allocation6], 64
    $region25: #{tpu_custom_call.1} parent=1 // pred_fallthru
      _
    %v55 = vld [vmem:[#allocation2] sm:$0xf]
    %v56 = vld [vmem:[#allocation2 + $0x4] sm:$0xf]
    %v57 = vld [vmem:[#allocation2 + $0x8] sm:$0xf]
    %v58 = vld [vmem:[#allocation2 + $0xc] sm:$0xf]
    %v59 = vld [vmem:[#allocation2 + $0x10] sm:$0xf]
    %v60 = vld [vmem:[#allocation2 + $0x14] sm:$0xf]
    %v61 = vld [vmem:[#allocation2 + $0x18] sm:$0xf]
    %v62 = vld [vmem:[#allocation2 + $0x1c] sm:$0xf]
    %v63 = vld [vmem:[#allocation2 + $0x20] sm:$0xf]
    %v64 = vld [vmem:[#allocation2 + $0x24] sm:$0xf]
    %v65 = vld [vmem:[#allocation2 + $0x28] sm:$0xf]
    %v66 = vld [vmem:[#allocation2 + $0x2c] sm:$0xf]
    %v67 = vld [vmem:[#allocation2 + $0x30] sm:$0xf]
    %v68 = vld [vmem:[#allocation2 + $0x34] sm:$0xf]
    %v69 = vld [vmem:[#allocation2 + $0x38] sm:$0xf]
    %v70 = vld [vmem:[#allocation2 + $0x3c] sm:$0xf]
    %v71 = vld [vmem:[#allocation2 + $0x40] sm:$0xf]
    %v72 = vld [vmem:[#allocation2 + $0x44] sm:$0xf]
    %v73 = vld [vmem:[#allocation5] sm:$0xff]
    %v74 = vld [vmem:[#allocation5 + $0x8] sm:$0xff]
    %v75 = vld [vmem:[#allocation5 + $0x10] sm:$0xff]
    %v76 = vld [vmem:[#allocation5 + $0x18] sm:$0xff]
    %v77 = vld [vmem:[#allocation5 + $0x20] sm:$0xff]
    %v78 = vld [vmem:[#allocation5 + $0x28] sm:$0xff]
    %v79 = vld [vmem:[#allocation5 + $0x30] sm:$0xff]
    %v80 = vld [vmem:[#allocation5 + $0x38] sm:$0xff]
    %v81 = vld [vmem:[#allocation5 + $0x40] sm:$0xff]
    %v82 = vld [vmem:[#allocation5 + $0x48] sm:$0xff]
    %v83 = vld [vmem:[#allocation5 + $0x50] sm:$0xff]
    %v84 = vld [vmem:[#allocation5 + $0x58] sm:$0xff]
    %v85 = vld [vmem:[#allocation5 + $0x60] sm:$0xff]
    %v86 = vld [vmem:[#allocation5 + $0x68] sm:$0xff]
    %v87 = vld [vmem:[#allocation5 + $0x70] sm:$0xff]
    %v88 = vld [vmem:[#allocation5 + $0x78] sm:$0xff]
    %v89 = vld [vmem:[#allocation5 + $0x80] sm:$0xff]
    %v90 = vld [vmem:[#allocation5 + $0x88] sm:$0xff]
    %v91 = vld [vmem:[#allocation5 + $0x90] sm:$0xff]
    %v92 = vld [vmem:[#allocation5 + $0x98] sm:$0xff]
    %v93 = vld [vmem:[#allocation5 + $0xa0] sm:$0xff]
    %v94 = vld [vmem:[#allocation5 + $0xa8] sm:$0xff]
    %v95 = vld [vmem:[#allocation5 + $0xb0] sm:$0xff]
    %v96 = vld [vmem:[#allocation5 + $0xb8] sm:$0xff]
    %v97 = vld [vmem:[#allocation5 + $0xc0] sm:$0xff]
    %v98 = vld [vmem:[#allocation5 + $0xc8] sm:$0xff]
    %v99 = vld [vmem:[#allocation5 + $0xd0] sm:$0xff]
    %v100 = vld [vmem:[#allocation5 + $0xd8] sm:$0xff]
    %v101 = vld [vmem:[#allocation5 + $0xe0] sm:$0xff]
    %v102 = vld [vmem:[#allocation5 + $0xe8] sm:$0xff]
    %v103 = vld [vmem:[#allocation5 + $0xf0] sm:$0xff]
    %v104 = vld [vmem:[#allocation5 + $0xf8] sm:$0xff]
    %v105 = vld [vmem:[#allocation7] sm:$0xf]
    %v107 = vlaneseq
    %v108 = vshrl.u32 %v107, 7
    %v109 = vsub.s32 0, %v108
    %v110 = vrot.slane %v105, %v109
    %v111 = vlaneseq
    %v112 = vshrl.u32 %v111, 7
    %v113 = vsub.s32 1, %v112
    %v114 = vrot.slane %v105, %v113
    %v115 = vlaneseq
    %v116 = vshrl.u32 %v115, 7
    %v117 = vsub.s32 2, %v116
    %v118 = vrot.slane %v105, %v117
    %v119 = vlaneseq
    %v120 = vshrl.u32 %v119, 7
    %v121 = vsub.s32 3, %v120
    %v122 = vrot.slane %v105, %v121
    %v145 = vunpack.c.l.b16 %v55
    %v146 = vunpack.c.l.b16 %v56
    %v147 = vunpack.c.l.b16 %v57
    %v148 = vunpack.c.l.b16 %v58
    %v149 = vunpack.c.l.b16 %v59
    %v150 = vunpack.c.l.b16 %v60
    %v151 = vunpack.c.l.b16 %v61
    %v152 = vunpack.c.l.b16 %v62
    %v153 = vunpack.c.l.b16 %v63
    %v154 = vunpack.c.l.b16 %v64
    %v155 = vunpack.c.l.b16 %v65
    %v156 = vunpack.c.l.b16 %v66
    %v157 = vunpack.c.l.b16 %v67
    %v158 = vunpack.c.l.b16 %v68
    %v159 = vunpack.c.l.b16 %v69
    %v160 = vunpack.c.l.b16 %v70
    %v161 = vunpack.c.l.b16 %v71
    %v162 = vunpack.c.l.b16 %v72
    %v163 = vpack.c.b16 %v146, %v145
    %v164 = vpack.c.b16 %v148, %v147
    %v165 = vpack.c.b16 %v150, %v149
    %v166 = vpack.c.b16 %v152, %v151
    %v167 = vpack.c.b16 %v154, %v153
    %v168 = vpack.c.b16 %v156, %v155
    %v169 = vpack.c.b16 %v158, %v157
    %v170 = vpack.c.b16 %v160, %v159
    %v171 = vpack.c.b16 %v162, %v161
    %v213 = vunpack.c.l.b16 %v73
    %v214 = vunpack.c.h.b16 %v73
    %v215 = vunpack.c.l.b16 %v74
    %v216 = vunpack.c.h.b16 %v74
    %v217 = vunpack.c.l.b16 %v75
    %v218 = vunpack.c.h.b16 %v75
    %v219 = vunpack.c.l.b16 %v76
    %v220 = vunpack.c.h.b16 %v76
    %v221 = vunpack.c.l.b16 %v77
    %v222 = vunpack.c.h.b16 %v77
    %v223 = vunpack.c.l.b16 %v78
    %v224 = vunpack.c.h.b16 %v78
    %v225 = vunpack.c.l.b16 %v79
    %v226 = vunpack.c.h.b16 %v79
    %v227 = vunpack.c.l.b16 %v80
    %v228 = vunpack.c.h.b16 %v80
    %v229 = vunpack.c.l.b16 %v81
    %v230 = vunpack.c.h.b16 %v81
    %v231 = vunpack.c.l.b16 %v82
    %v232 = vunpack.c.h.b16 %v82
    %v233 = vunpack.c.l.b16 %v83
    %v234 = vunpack.c.h.b16 %v83
    %v235 = vunpack.c.l.b16 %v84
    %v236 = vunpack.c.h.b16 %v84
    %v237 = vunpack.c.l.b16 %v85
    %v238 = vunpack.c.h.b16 %v85
    %v239 = vunpack.c.l.b16 %v86
    %v240 = vunpack.c.h.b16 %v86
    %v241 = vunpack.c.l.b16 %v87
    %v242 = vunpack.c.h.b16 %v87
    %v243 = vunpack.c.l.b16 %v88
    %v244 = vunpack.c.h.b16 %v88
    %v245 = vunpack.c.l.b16 %v89
    %v246 = vunpack.c.h.b16 %v89
    %v247 = vunpack.c.l.b16 %v90
    %v248 = vunpack.c.h.b16 %v90
    %v249 = vunpack.c.l.b16 %v91
    %v250 = vunpack.c.h.b16 %v91
    %v251 = vunpack.c.l.b16 %v92
    %v252 = vunpack.c.h.b16 %v92
    %v253 = vunpack.c.l.b16 %v93
    %v254 = vunpack.c.h.b16 %v93
    %v255 = vunpack.c.l.b16 %v94
    %v256 = vunpack.c.h.b16 %v94
    %v257 = vunpack.c.l.b16 %v95
    %v258 = vunpack.c.h.b16 %v95
    %v259 = vunpack.c.l.b16 %v96
    %v260 = vunpack.c.h.b16 %v96
    %v261 = vunpack.c.l.b16 %v97
    %v262 = vunpack.c.h.b16 %v97
    %v263 = vunpack.c.l.b16 %v98
    %v264 = vunpack.c.h.b16 %v98
    %v265 = vunpack.c.l.b16 %v99
    %v266 = vunpack.c.h.b16 %v99
    %v267 = vunpack.c.l.b16 %v100
    %v268 = vunpack.c.h.b16 %v100
    %v269 = vunpack.c.l.b16 %v101
    %v270 = vunpack.c.h.b16 %v101
    %v271 = vunpack.c.l.b16 %v102
    %v272 = vunpack.c.h.b16 %v102
    %v273 = vunpack.c.l.b16 %v103
    %v274 = vunpack.c.h.b16 %v103
    %v275 = vunpack.c.l.b16 %v104
    %v276 = vunpack.c.h.b16 %v104
    %v277 = vpack.c.b16 %v217, %v213
    %v278 = vpack.c.b16 %v218, %v214
    %v279 = vpack.c.b16 %v219, %v215
    %v280 = vpack.c.b16 %v220, %v216
    %v281 = vpack.c.b16 %v225, %v221
    %v282 = vpack.c.b16 %v226, %v222
    %v283 = vpack.c.b16 %v227, %v223
    %v284 = vpack.c.b16 %v228, %v224
    %v285 = vpack.c.b16 %v233, %v229
    %v286 = vpack.c.b16 %v234, %v230
    %v287 = vpack.c.b16 %v235, %v231
    %v288 = vpack.c.b16 %v236, %v232
    %v289 = vpack.c.b16 %v241, %v237
    %v290 = vpack.c.b16 %v242, %v238
    %v291 = vpack.c.b16 %v243, %v239
    %v292 = vpack.c.b16 %v244, %v240
    %v293 = vpack.c.b16 %v249, %v245
    %v294 = vpack.c.b16 %v250, %v246
    %v295 = vpack.c.b16 %v251, %v247
    %v296 = vpack.c.b16 %v252, %v248
    %v297 = vpack.c.b16 %v257, %v253
    %v298 = vpack.c.b16 %v258, %v254
    %v299 = vpack.c.b16 %v259, %v255
    %v300 = vpack.c.b16 %v260, %v256
    %v301 = vpack.c.b16 %v265, %v261
    %v302 = vpack.c.b16 %v266, %v262
    %v303 = vpack.c.b16 %v267, %v263
    %v304 = vpack.c.b16 %v268, %v264
    %v305 = vpack.c.b16 %v273, %v269
    %v306 = vpack.c.b16 %v274, %v270
    %v307 = vpack.c.b16 %v275, %v271
    %v308 = vpack.c.b16 %v276, %v272
    %341 = vmatprep.subr.bf16.mxu0 %v278
    %342 = vmatpush1.bf16.msra.mxu0 %v277
    %343 = vmatprep.subr.bf16.mxu0 %v282
    %344 = vmatpush1.bf16.msra.mxu0 %v281
    %345 = vmatprep.subr.bf16.mxu0 %v286
    %346 = vmatpush1.bf16.msra.mxu0 %v285
    %347 = vmatprep.subr.bf16.mxu0 %v290
    %348 = vmatpush1.bf16.msra.mxu0 %v289
    %349 = vmatprep.subr.bf16.mxu0 %v294
    %350 = vmatpush1.bf16.msra.mxu0 %v293
    %351 = vmatprep.subr.bf16.mxu0 %v298
    %352 = vmatpush1.bf16.msra.mxu0 %v297
    %353 = vmatprep.subr.bf16.mxu0 %v302
    %354 = vmatpush1.bf16.msra.mxu0 %v301
    %355 = vmatprep.subr.bf16.mxu0 %v306
    %356 = vmatpush1.bf16.msra.mxu0 %v305
    %357 = vmatprep.subr.bf16.mxu0 0
    %358 = vmatpush1.bf16.msra.mxu0 0
    %359 = vmatprep.subr.bf16.mxu0 0
    %360 = vmatpush1.bf16.msra.mxu0 0
    %361 = vmatprep.subr.bf16.mxu0 0
    %362 = vmatpush1.bf16.msra.mxu0 0
    %363 = vmatprep.subr.bf16.mxu0 0
    %364 = vmatpush1.bf16.msra.mxu0 0
    %365 = vmatprep.subr.bf16.mxu0 0
    %366 = vmatpush1.bf16.msra.mxu0 0
    %367 = vmatprep.subr.bf16.mxu0 0
    %368 = vmatpush1.bf16.msra.mxu0 0
    %369 = vmatprep.subr.bf16.mxu0 0
    %370 = vmatpush1.bf16.msra.mxu0 0
    %371 = vmatprep.subr.bf16.mxu0 0
    %372 = vmatpush1.bf16.msra.mxu0 0
    %373 = vmatprep.mubr.bf16.mxu0 0
    %374 = vmatmul.mubr.bf16.gmra.mrb[0].mxu0 %v163
    %v375 = vpop.f32.mrb[0].mxu0
    %v376 = vadd.f32 %v110, %v375
    %v377 = vpop.f32.mrb[0].mxu0
    %v378 = vadd.f32 %v114, %v377
    %v379 = vpop.f32.mrb[0].mxu0
    %v380 = vadd.f32 %v110, %v379
    %v381 = vpop.f32.mrb[0].mxu0
    %v382 = vadd.f32 %v114, %v381
    %383 = vmatprep.mubr.bf16.mxu0 0
    %384 = vmatmul.mubr.bf16.gmra.mrb[0].mxu0 %v164
    %v385 = vpop.f32.mrb[0].mxu0
    %v386 = vadd.f32 %v110, %v385
    %v387 = vpop.f32.mrb[0].mxu0
    %v388 = vadd.f32 %v114, %v387
    %v389 = vpop.f32.mrb[0].mxu0
    %v390 = vadd.f32 %v110, %v389
    %v391 = vpop.f32.mrb[0].mxu0
    %v392 = vadd.f32 %v114, %v391
    %393 = vmatprep.mubr.bf16.mxu0 0
    %394 = vmatmul.mubr.bf16.gmra.mrb[0].mxu0 %v165
    %v395 = vpop.f32.mrb[0].mxu0
    %v396 = vadd.f32 %v110, %v395
    %v397 = vpop.f32.mrb[0].mxu0
    %v398 = vadd.f32 %v114, %v397
    %v399 = vpop.f32.mrb[0].mxu0
    %v400 = vadd.f32 %v110, %v399
    %v401 = vpop.f32.mrb[0].mxu0
    %v402 = vadd.f32 %v114, %v401
    %403 = vmatprep.mubr.bf16.mxu0 0
    %404 = vmatmul.mubr.bf16.gmra.mrb[0].mxu0 %v166
    %v405 = vpop.f32.mrb[0].mxu0
    %v406 = vadd.f32 %v110, %v405
    %v407 = vpop.f32.mrb[0].mxu0
    %v408 = vadd.f32 %v114, %v407
    %v409 = vpop.f32.mrb[0].mxu0
    %v410 = vadd.f32 %v110, %v409
    %v411 = vpop.f32.mrb[0].mxu0
    %v412 = vadd.f32 %v114, %v411
    %413 = vmatprep.mubr.bf16.mxu0 0
    %414 = vmatmul.mubr.bf16.gmra.mrb[0].mxu0 %v167
    %v415 = vpop.f32.mrb[0].mxu0
    %v416 = vadd.f32 %v110, %v415
    %v417 = vpop.f32.mrb[0].mxu0
    %v418 = vadd.f32 %v114, %v417
    %v419 = vpop.f32.mrb[0].mxu0
    %v420 = vadd.f32 %v110, %v419
    %v421 = vpop.f32.mrb[0].mxu0
    %v422 = vadd.f32 %v114, %v421
    %423 = vmatprep.mubr.bf16.mxu0 0
    %424 = vmatmul.mubr.bf16.gmra.mrb[0].mxu0 %v168
    %v425 = vpop.f32.mrb[0].mxu0
    %v426 = vadd.f32 %v110, %v425
    %v427 = vpop.f32.mrb[0].mxu0
    %v428 = vadd.f32 %v114, %v427
    %v429 = vpop.f32.mrb[0].mxu0
    %v430 = vadd.f32 %v110, %v429
    %v431 = vpop.f32.mrb[0].mxu0
    %v432 = vadd.f32 %v114, %v431
    %433 = vmatprep.mubr.bf16.mxu0 0
    %434 = vmatmul.mubr.bf16.gmra.mrb[0].mxu0 %v169
    %v435 = vpop.f32.mrb[0].mxu0
    %v436 = vadd.f32 %v110, %v435
    %v437 = vpop.f32.mrb[0].mxu0
    %v438 = vadd.f32 %v114, %v437
    %v439 = vpop.f32.mrb[0].mxu0
    %v440 = vadd.f32 %v110, %v439
    %v441 = vpop.f32.mrb[0].mxu0
    %v442 = vadd.f32 %v114, %v441
    %443 = vmatprep.mubr.bf16.mxu0 0
    %444 = vmatmul.mubr.bf16.gmra.mrb[0].mxu0 %v170
    %v445 = vpop.f32.mrb[0].mxu0
    %v446 = vadd.f32 %v110, %v445
    %v447 = vpop.f32.mrb[0].mxu0
    %v448 = vadd.f32 %v114, %v447
    %v449 = vpop.f32.mrb[0].mxu0
    %v450 = vadd.f32 %v110, %v449
    %v451 = vpop.f32.mrb[0].mxu0
    %v452 = vadd.f32 %v114, %v451
    %453 = vmatprep.mubr.bf16.mxu0 0
    %454 = vmatmul.mubr.bf16.gmra.mrb[0].mxu0 %v171
    %v455 = vpop.f32.mrb[0].mxu0
    %v456 = vadd.f32 %v110, %v455
    %v457 = vpop.f32.mrb[0].mxu0
    %v458 = vadd.f32 %v114, %v457
    %v459 = vpop.f32.mrb[0].mxu0
    %v460 = vadd.f32 %v110, %v459
    %v461 = vpop.f32.mrb[0].mxu0
    %v462 = vadd.f32 %v114, %v461
    %463 = vdwg.mxu0
    %464 = vmatprep.subr.bf16.mxu0 %v280
    %465 = vmatpush1.bf16.msra.mxu0 %v279
    %466 = vmatprep.subr.bf16.mxu0 %v284
    %467 = vmatpush1.bf16.msra.mxu0 %v283
    %468 = vmatprep.subr.bf16.mxu0 %v288
    %469 = vmatpush1.bf16.msra.mxu0 %v287
    %470 = vmatprep.subr.bf16.mxu0 %v292
    %471 = vmatpush1.bf16.msra.mxu0 %v291
    %472 = vmatprep.subr.bf16.mxu0 %v296
    %473 = vmatpush1.bf16.msra.mxu0 %v295
    %474 = vmatprep.subr.bf16.mxu0 %v300
    %475 = vmatpush1.bf16.msra.mxu0 %v299
    %476 = vmatprep.subr.bf16.mxu0 %v304
    %477 = vmatpush1.bf16.msra.mxu0 %v303
    %478 = vmatprep.subr.bf16.mxu0 %v308
    %479 = vmatpush1.bf16.msra.mxu0 %v307
    %480 = vmatprep.subr.bf16.mxu0 0
    %481 = vmatpush1.bf16.msra.mxu0 0
    %482 = vmatprep.subr.bf16.mxu0 0
    %483 = vmatpush1.bf16.msra.mxu0 0
    %484 = vmatprep.subr.bf16.mxu0 0
    %485 = vmatpush1.bf16.msra.mxu0 0
    %486 = vmatprep.subr.bf16.mxu0 0
    %487 = vmatpush1.bf16.msra.mxu0 0
    %488 = vmatprep.subr.bf16.mxu0 0
    %489 = vmatpush1.bf16.msra.mxu0 0
    %490 = vmatprep.subr.bf16.mxu0 0
    %491 = vmatpush1.bf16.msra.mxu0 0
    %492 = vmatprep.subr.bf16.mxu0 0
    %493 = vmatpush1.bf16.msra.mxu0 0
    %494 = vmatprep.subr.bf16.mxu0 0
    %495 = vmatpush1.bf16.msra.mxu0 0
    %496 = vmatprep.mubr.bf16.mxu0 0
    %497 = vmatmul.mubr.bf16.gmra.mrb[0].mxu0 %v163
    %v498 = vpop.f32.mrb[0].mxu0
    %v499 = vadd.f32 %v118, %v498
    %v500 = vpop.f32.mrb[0].mxu0
    %v501 = vadd.f32 %v122, %v500
    %v502 = vpop.f32.mrb[0].mxu0
    %v503 = vadd.f32 %v118, %v502
    %v504 = vpop.f32.mrb[0].mxu0
    %v505 = vadd.f32 %v122, %v504
    %506 = vmatprep.mubr.bf16.mxu0 0
    %507 = vmatmul.mubr.bf16.gmra.mrb[0].mxu0 %v164
    %v508 = vpop.f32.mrb[0].mxu0
    %v509 = vadd.f32 %v118, %v508
    %v510 = vpop.f32.mrb[0].mxu0
    %v511 = vadd.f32 %v122, %v510
    %v512 = vpop.f32.mrb[0].mxu0
    %v513 = vadd.f32 %v118, %v512
    %v514 = vpop.f32.mrb[0].mxu0
    %v515 = vadd.f32 %v122, %v514
    %516 = vmatprep.mubr.bf16.mxu0 0
    %517 = vmatmul.mubr.bf16.gmra.mrb[0].mxu0 %v165
    %v518 = vpop.f32.mrb[0].mxu0
    %v519 = vadd.f32 %v118, %v518
    %v520 = vpop.f32.mrb[0].mxu0
    %v521 = vadd.f32 %v122, %v520
    %v522 = vpop.f32.mrb[0].mxu0
    %v523 = vadd.f32 %v118, %v522
    %v524 = vpop.f32.mrb[0].mxu0
    %v525 = vadd.f32 %v122, %v524
    %526 = vmatprep.mubr.bf16.mxu0 0
    %527 = vmatmul.mubr.bf16.gmra.mrb[0].mxu0 %v166
    %v528 = vpop.f32.mrb[0].mxu0
    %v529 = vadd.f32 %v118, %v528
    %v530 = vpop.f32.mrb[0].mxu0
    %v531 = vadd.f32 %v122, %v530
    %v532 = vpop.f32.mrb[0].mxu0
    %v533 = vadd.f32 %v118, %v532
    %v534 = vpop.f32.mrb[0].mxu0
    %v535 = vadd.f32 %v122, %v534
    %536 = vmatprep.mubr.bf16.mxu0 0
    %537 = vmatmul.mubr.bf16.gmra.mrb[0].mxu0 %v167
    %v538 = vpop.f32.mrb[0].mxu0
    %v539 = vadd.f32 %v118, %v538
    %v540 = vpop.f32.mrb[0].mxu0
    %v541 = vadd.f32 %v122, %v540
    %v542 = vpop.f32.mrb[0].mxu0
    %v543 = vadd.f32 %v118, %v542
    %v544 = vpop.f32.mrb[0].mxu0
    %v545 = vadd.f32 %v122, %v544
    %546 = vmatprep.mubr.bf16.mxu0 0
    %547 = vmatmul.mubr.bf16.gmra.mrb[0].mxu0 %v168
    %v548 = vpop.f32.mrb[0].mxu0
    %v549 = vadd.f32 %v118, %v548
    %v550 = vpop.f32.mrb[0].mxu0
    %v551 = vadd.f32 %v122, %v550
    %v552 = vpop.f32.mrb[0].mxu0
    %v553 = vadd.f32 %v118, %v552
    %v554 = vpop.f32.mrb[0].mxu0
    %v555 = vadd.f32 %v122, %v554
    %556 = vmatprep.mubr.bf16.mxu0 0
    %557 = vmatmul.mubr.bf16.gmra.mrb[0].mxu0 %v169
    %v558 = vpop.f32.mrb[0].mxu0
    %v559 = vadd.f32 %v118, %v558
    %v560 = vpop.f32.mrb[0].mxu0
    %v561 = vadd.f32 %v122, %v560
    %v562 = vpop.f32.mrb[0].mxu0
    %v563 = vadd.f32 %v118, %v562
    %v564 = vpop.f32.mrb[0].mxu0
    %v565 = vadd.f32 %v122, %v564
    %566 = vmatprep.mubr.bf16.mxu0 0
    %567 = vmatmul.mubr.bf16.gmra.mrb[0].mxu0 %v170
    %v568 = vpop.f32.mrb[0].mxu0
    %v569 = vadd.f32 %v118, %v568
    %v570 = vpop.f32.mrb[0].mxu0
    %v571 = vadd.f32 %v122, %v570
    %v572 = vpop.f32.mrb[0].mxu0
    %v573 = vadd.f32 %v118, %v572
    %v574 = vpop.f32.mrb[0].mxu0
    %v575 = vadd.f32 %v122, %v574
    %576 = vmatprep.mubr.bf16.mxu0 0
    %577 = vmatmul.mubr.bf16.gmra.mrb[0].mxu0 %v171
    %v578 = vpop.f32.mrb[0].mxu0
    %v579 = vadd.f32 %v118, %v578
    %v580 = vpop.f32.mrb[0].mxu0
    %v581 = vadd.f32 %v122, %v580
    %v582 = vpop.f32.mrb[0].mxu0
    %v583 = vadd.f32 %v118, %v582
    %v584 = vpop.f32.mrb[0].mxu0
    %v585 = vadd.f32 %v122, %v584
    %586 = vdwg.mxu0
    %v587 = vpack.c.bf16 %v380, %v376
    %v588 = vpack.c.bf16 %v382, %v378
    %v589 = vpack.c.bf16 %v503, %v499
    %v590 = vpack.c.bf16 %v505, %v501
    %v591 = vpack.c.bf16 %v390, %v386
    %v592 = vpack.c.bf16 %v392, %v388
    %v593 = vpack.c.bf16 %v513, %v509
    %v594 = vpack.c.bf16 %v515, %v511
    %v595 = vpack.c.bf16 %v400, %v396
    %v596 = vpack.c.bf16 %v402, %v398
    %v597 = vpack.c.bf16 %v523, %v519
    %v598 = vpack.c.bf16 %v525, %v521
    %v599 = vpack.c.bf16 %v410, %v406
    %v600 = vpack.c.bf16 %v412, %v408
    %v601 = vpack.c.bf16 %v533, %v529
    %v602 = vpack.c.bf16 %v535, %v531
    %v603 = vpack.c.bf16 %v420, %v416
    %v604 = vpack.c.bf16 %v422, %v418
    %v605 = vpack.c.bf16 %v543, %v539
    %v606 = vpack.c.bf16 %v545, %v541
    %v607 = vpack.c.bf16 %v430, %v426
    %v608 = vpack.c.bf16 %v432, %v428
    %v609 = vpack.c.bf16 %v553, %v549
    %v610 = vpack.c.bf16 %v555, %v551
    %v611 = vpack.c.bf16 %v440, %v436
    %v612 = vpack.c.bf16 %v442, %v438
    %v613 = vpack.c.bf16 %v563, %v559
    %v614 = vpack.c.bf16 %v565, %v561
    %v615 = vpack.c.bf16 %v450, %v446
    %v616 = vpack.c.bf16 %v452, %v448
    %v617 = vpack.c.bf16 %v573, %v569
    %v618 = vpack.c.bf16 %v575, %v571
    %v619 = vpack.c.bf16 %v460, %v456
    %v620 = vpack.c.bf16 %v462, %v458
    %v621 = vpack.c.bf16 %v583, %v579
    %v622 = vpack.c.bf16 %v585, %v581
    %v659 = vunpack.c.l.b16 %v587
    %v660 = vunpack.c.l.b16 %v588
    %v661 = vunpack.c.l.b16 %v589
    %v662 = vunpack.c.l.b16 %v590
    %v663 = vunpack.c.h.b16 %v587
    %v664 = vunpack.c.h.b16 %v588
    %v665 = vunpack.c.h.b16 %v589
    %v666 = vunpack.c.h.b16 %v590
    %v667 = vunpack.c.l.b16 %v591
    %v668 = vunpack.c.l.b16 %v592
    %v669 = vunpack.c.l.b16 %v593
    %v670 = vunpack.c.l.b16 %v594
    %v671 = vunpack.c.h.b16 %v591
    %v672 = vunpack.c.h.b16 %v592
    %v673 = vunpack.c.h.b16 %v593
    %v674 = vunpack.c.h.b16 %v594
    %v675 = vunpack.c.l.b16 %v595
    %v676 = vunpack.c.l.b16 %v596
    %v677 = vunpack.c.l.b16 %v597
    %v678 = vunpack.c.l.b16 %v598
    %v679 = vunpack.c.h.b16 %v595
    %v680 = vunpack.c.h.b16 %v596
    %v681 = vunpack.c.h.b16 %v597
    %v682 = vunpack.c.h.b16 %v598
    %v683 = vunpack.c.l.b16 %v599
    %v684 = vunpack.c.l.b16 %v600
    %v685 = vunpack.c.l.b16 %v601
    %v686 = vunpack.c.l.b16 %v602
    %v687 = vunpack.c.h.b16 %v599
    %v688 = vunpack.c.h.b16 %v600
    %v689 = vunpack.c.h.b16 %v601
    %v690 = vunpack.c.h.b16 %v602
    %v691 = vunpack.c.l.b16 %v603
    %v692 = vunpack.c.l.b16 %v604
    %v693 = vunpack.c.l.b16 %v605
    %v694 = vunpack.c.l.b16 %v606
    %v695 = vunpack.c.h.b16 %v603
    %v696 = vunpack.c.h.b16 %v604
    %v697 = vunpack.c.h.b16 %v605
    %v698 = vunpack.c.h.b16 %v606
    %v699 = vunpack.c.l.b16 %v607
    %v700 = vunpack.c.l.b16 %v608
    %v701 = vunpack.c.l.b16 %v609
    %v702 = vunpack.c.l.b16 %v610
    %v703 = vunpack.c.h.b16 %v607
    %v704 = vunpack.c.h.b16 %v608
    %v705 = vunpack.c.h.b16 %v609
    %v706 = vunpack.c.h.b16 %v610
    %v707 = vunpack.c.l.b16 %v611
    %v708 = vunpack.c.l.b16 %v612
    %v709 = vunpack.c.l.b16 %v613
    %v710 = vunpack.c.l.b16 %v614
    %v711 = vunpack.c.h.b16 %v611
    %v712 = vunpack.c.h.b16 %v612
    %v713 = vunpack.c.h.b16 %v613
    %v714 = vunpack.c.h.b16 %v614
    %v715 = vunpack.c.l.b16 %v615
    %v716 = vunpack.c.l.b16 %v616
    %v717 = vunpack.c.l.b16 %v617
    %v718 = vunpack.c.l.b16 %v618
    %v719 = vunpack.c.h.b16 %v615
    %v720 = vunpack.c.h.b16 %v616
    %v721 = vunpack.c.h.b16 %v617
    %v722 = vunpack.c.h.b16 %v618
    %v723 = vunpack.c.l.b16 %v619
    %v724 = vunpack.c.l.b16 %v620
    %v725 = vunpack.c.l.b16 %v621
    %v726 = vunpack.c.l.b16 %v622
    %v727 = vunpack.c.h.b16 %v619
    %v728 = vunpack.c.h.b16 %v620
    %v729 = vunpack.c.h.b16 %v621
    %v730 = vunpack.c.h.b16 %v622
    %v731 = vpack.c.b16 %v660, %v659
    %v732 = vpack.c.b16 %v662, %v661
    %v733 = vpack.c.b16 %v664, %v663
    %v734 = vpack.c.b16 %v666, %v665
    %v735 = vpack.c.b16 %v668, %v667
    %v736 = vpack.c.b16 %v670, %v669
    %v737 = vpack.c.b16 %v672, %v671
    %v738 = vpack.c.b16 %v674, %v673
    %v739 = vpack.c.b16 %v676, %v675
    %v740 = vpack.c.b16 %v678, %v677
    %v741 = vpack.c.b16 %v680, %v679
    %v742 = vpack.c.b16 %v682, %v681
    %v743 = vpack.c.b16 %v684, %v683
    %v744 = vpack.c.b16 %v686, %v685
    %v745 = vpack.c.b16 %v688, %v687
    %v746 = vpack.c.b16 %v690, %v689
    %v747 = vpack.c.b16 %v692, %v691
    %v748 = vpack.c.b16 %v694, %v693
    %v749 = vpack.c.b16 %v696, %v695
    %v750 = vpack.c.b16 %v698, %v697
    %v751 = vpack.c.b16 %v700, %v699
    %v752 = vpack.c.b16 %v702, %v701
    %v753 = vpack.c.b16 %v704, %v703
    %v754 = vpack.c.b16 %v706, %v705
    %v755 = vpack.c.b16 %v708, %v707
    %v756 = vpack.c.b16 %v710, %v709
    %v757 = vpack.c.b16 %v712, %v711
    %v758 = vpack.c.b16 %v714, %v713
    %v759 = vpack.c.b16 %v716, %v715
    %v760 = vpack.c.b16 %v718, %v717
    %v761 = vpack.c.b16 %v720, %v719
    %v762 = vpack.c.b16 %v722, %v721
    %v763 = vpack.c.b16 %v724, %v723
    %v764 = vpack.c.b16 %v726, %v725
    %v765 = vpack.c.b16 %v728, %v727
    %v766 = vpack.c.b16 %v730, %v729
    %803 = vst [vmem:[#allocation8] sm:$0xff] %v731
    %804 = vst [vmem:[#allocation8 + $0x8] sm:$0xff] %v732
    %805 = vst [vmem:[#allocation8 + $0x10] sm:$0xff] %v733
    %806 = vst [vmem:[#allocation8 + $0x18] sm:$0xff] %v734
    %807 = vst [vmem:[#allocation8 + $0x20] sm:$0xff] %v735
    %808 = vst [vmem:[#allocation8 + $0x28] sm:$0xff] %v736
    %809 = vst [vmem:[#allocation8 + $0x30] sm:$0xff] %v737
    %810 = vst [vmem:[#allocation8 + $0x38] sm:$0xff] %v738
    %811 = vst [vmem:[#allocation8 + $0x40] sm:$0xff] %v739
    %812 = vst [vmem:[#allocation8 + $0x48] sm:$0xff] %v740
    %813 = vst [vmem:[#allocation8 + $0x50] sm:$0xff] %v741
    %814 = vst [vmem:[#allocation8 + $0x58] sm:$0xff] %v742
    %815 = vst [vmem:[#allocation8 + $0x60] sm:$0xff] %v743
    %816 = vst [vmem:[#allocation8 + $0x68] sm:$0xff] %v744
    %817 = vst [vmem:[#allocation8 + $0x70] sm:$0xff] %v745
    %818 = vst [vmem:[#allocation8 + $0x78] sm:$0xff] %v746
    %819 = vst [vmem:[#allocation8 + $0x80] sm:$0xff] %v747
    %820 = vst [vmem:[#allocation8 + $0x88] sm:$0xff] %v748
    %821 = vst [vmem:[#allocation8 + $0x90] sm:$0xff] %v749
    %822 = vst [vmem:[#allocation8 + $0x98] sm:$0xff] %v750
    %823 = vst [vmem:[#allocation8 + $0xa0] sm:$0xff] %v751
    %824 = vst [vmem:[#allocation8 + $0xa8] sm:$0xff] %v752
    %825 = vst [vmem:[#allocation8 + $0xb0] sm:$0xff] %v753
    %826 = vst [vmem:[#allocation8 + $0xb8] sm:$0xff] %v754
    %827 = vst [vmem:[#allocation8 + $0xc0] sm:$0xff] %v755
    %828 = vst [vmem:[#allocation8 + $0xc8] sm:$0xff] %v756
    %829 = vst [vmem:[#allocation8 + $0xd0] sm:$0xff] %v757
    %830 = vst [vmem:[#allocation8 + $0xd8] sm:$0xff] %v758
    %831 = vst [vmem:[#allocation8 + $0xe0] sm:$0xff] %v759
    %832 = vst [vmem:[#allocation8 + $0xe8] sm:$0xff] %v760
    %833 = vst [vmem:[#allocation8 + $0xf0] sm:$0xff] %v761
    %834 = vst [vmem:[#allocation8 + $0xf8] sm:$0xff] %v762
    %835 = vst [vmem:[#allocation8 + $0x100] sm:$0xff] %v763
    %836 = vst [vmem:[#allocation8 + $0x108] sm:$0xff] %v764
    %837 = vst [vmem:[#allocation8 + $0x110] sm:$0xff] %v765
    %838 = vst [vmem:[#allocation8 + $0x118] sm:$0xff] %v766
    // Predicated region
    $region26: #{tpu_custom_call.1} parent=1 // pred_check
      _
    $region27: #{tpu_custom_call.1} parent=1 // pred_check_branch
      %840 = sbr.rel (0) target = $region29
    $region28: #{tpu_custom_call.1} parent=1 // pred_region
      %s842 = ssub.s32 4608, 4608
      %843 = vsyncadd [#allocation4], %s842
      %s844 = sshll.u32 [#allocation8], 4
      %s845 = int_to_ptr.vmem [resolvable:$true] %s844
      %850 = dma.vmem_to_hbm [thread:$0]  %s845, 4608, %s3, [#allocation4], 256, 256, 16
    $region29: #{tpu_custom_call.1} parent=1 // pred_fallthru
      _
    // Predicated region
    $region30: #{tpu_custom_call.1} parent=1 // pred_check
      _
    $region31: #{tpu_custom_call.1} parent=1 // pred_check_branch
      %852 = sbr.rel (0) target = $region33
    $region32: #{tpu_custom_call.1} parent=1 // pred_region
      %853 = dma.done [#allocation4], 4608
    $region33: #{tpu_custom_call.1} parent=1 // pred_fallthru
      _
    %854 = vsyncpa [#allocation3], 1
    %855 = vsyncpa [#allocation6], 1
    %856 = vsyncpa [#allocation4], 1

</llo_original>
